<compile_context>
chip_gen: v5e
topology: v5e:2x2
jax: 0.10.0
libtpu: 0.0.40
codegen_flags: <defaults>
</compile_context>

<pallas_src>
import functools

import jax
import jax.numpy as jnp
from jax import lax
from jax.experimental import pallas as pl
from jax.experimental.pallas import tpu as pltpu


# ------------------------------ small helpers -------------------------------

def _round_up(x, m):
    return (x + m - 1) // m * m


def _pad2d(a, rows, cols):
    r, c = a.shape
    if r == rows and c == cols:
        return a
    return jnp.pad(a, ((0, rows - r), (0, cols - c)))


# ------------------------------ Pallas kernels ------------------------------

def _matmul_kernel(*refs, relu, prologue):
    # prologue=True:  refs = (x, w, b, scale, shift, out, acc)
    # prologue=False: refs = (x, w, b, out, acc)
    if prologue:
        x_ref, w_ref, b_ref, sc_ref, sh_ref, o_ref, acc_ref = refs
    else:
        x_ref, w_ref, b_ref, o_ref, acc_ref = refs
        sc_ref = sh_ref = None

    k = pl.program_id(2)

    @pl.when(k == 0)
    def _():
        acc_ref[...] = jnp.zeros_like(acc_ref)

    x = x_ref[...]
    if prologue:
        # Fused BatchNorm affine + ReLU on the matmul input (per K-channel).
        xn = x.astype(jnp.float32) * sc_ref[...] + sh_ref[...]
        x = jnp.maximum(xn, 0.0).astype(jnp.bfloat16)

    acc_ref[...] += jnp.dot(x, w_ref[...], preferred_element_type=jnp.float32)

    @pl.when(k == pl.num_programs(2) - 1)
    def _():
        out = acc_ref[...] + b_ref[...]
        if relu:
            out = jnp.maximum(out, 0.0)
        o_ref[...] = out.astype(o_ref.dtype)


def _bn_stats_kernel(x_ref, sum_ref, sq_ref, *, m_valid, tm):
    # Per-channel sum / sum-of-squares accumulated across row tiles (global
    # BatchNorm batch statistics; padded rows are masked out).
    m = pl.program_id(0)

    @pl.when(m == 0)
    def _():
        sum_ref[...] = jnp.zeros_like(sum_ref)
        sq_ref[...] = jnp.zeros_like(sq_ref)

    x = x_ref[...].astype(jnp.float32)
    row = m * tm + lax.broadcasted_iota(jnp.int32, x.shape, 0)
    x = jnp.where(row < m_valid, x, 0.0)
    sum_ref[...] += jnp.sum(x, axis=0, keepdims=True)
    sq_ref[...] += jnp.sum(x * x, axis=0, keepdims=True)


# -------------------------------- wrappers -----------------------------------

def _tiled_matmul(x, w, b, *, relu, out_dtype, scale=None, shift=None):
    """out = [relu]( maybe_relu(scale*x+shift) @ w + b ).

    x: (M, K) bf16, w: (K, N) bf16, b: (1, N) f32.  K and N must already be
    padded to multiples of 128.  Optional per-K-channel affine+ReLU prologue
    (scale/shift: (1, K) f32).  Rows are padded to a tile multiple; callers
    slice the result back to M rows.
    """
    M, K = x.shape
    K2, N = w.shape
    assert K == K2 and K % 128 == 0 and N % 128 == 0
    prologue = scale is not None

    tm = min(256, _round_up(M, 8))
    Mp = _round_up(M, tm)
    tn = 256 if N % 256 == 0 else 128
    tk = max(t for t in (512, 384, 256, 128) if K % t == 0)

    if Mp != M:
        x = jnp.pad(x, ((0, Mp - M), (0, 0)))

    grid = (Mp // tm, N // tn, K // tk)
    kernel = functools.partial(_matmul_kernel, relu=relu, prologue=prologue)

    in_specs = [
        pl.BlockSpec((tm, tk), lambda m, n, k: (m, k)),
        pl.BlockSpec((tk, tn), lambda m, n, k: (k, n)),
        pl.BlockSpec((1, tn), lambda m, n, k: (0, n)),
    ]
    inputs = [x, w, b]
    if prologue:
        in_specs += [
            pl.BlockSpec((1, tk), lambda m, n, k: (0, k)),
            pl.BlockSpec((1, tk), lambda m, n, k: (0, k)),
        ]
        inputs += [scale, shift]

    return pl.pallas_call(
        kernel,
        out_shape=jax.ShapeDtypeStruct((Mp, N), out_dtype),
        grid=grid,
        in_specs=in_specs,
        out_specs=pl.BlockSpec((tm, tn), lambda m, n, k: (m, n)),
        scratch_shapes=[pltpu.VMEM((tm, tn), jnp.float32)],
        compiler_params=pltpu.CompilerParams(
            dimension_semantics=("parallel", "parallel", "arbitrary"),
            vmem_limit_bytes=48 * 1024 * 1024,
        ),
    )(*inputs)


def _bn_batch_stats(y, m_valid):
    # y: (Mp, Cp) bf16.  Returns per-channel (sum, sumsq), each (1, Cp) f32,
    # over the first m_valid rows (padded rows masked inside the kernel).
    Mp, Cp = y.shape
    tm = max(t for t in (512, 256, 128, 64, 32, 16, 8) if Mp % t == 0)
    kernel = functools.partial(_bn_stats_kernel, m_valid=m_valid, tm=tm)
    out_shape = (jax.ShapeDtypeStruct((1, Cp), jnp.float32),
                 jax.ShapeDtypeStruct((1, Cp), jnp.float32))
    return pl.pallas_call(
        kernel,
        out_shape=out_shape,
        grid=(Mp // tm,),
        in_specs=[pl.BlockSpec((tm, Cp), lambda m: (m, 0))],
        out_specs=(pl.BlockSpec((1, Cp), lambda m: (0, 0)),
                   pl.BlockSpec((1, Cp), lambda m: (0, 0))),
        compiler_params=pltpu.CompilerParams(
            dimension_semantics=("arbitrary",)),
    )(y)


def _im2col_3x3(x_nhwc):
    # (N, H, W, C) -> (N*H*W, 9*C); tap-major (kh, kw) then channel ordering.
    N, H, W, C = x_nhwc.shape
    xp = jnp.pad(x_nhwc, ((0, 0), (1, 1), (1, 1), (0, 0)))
    taps = [xp[:, kh:kh + H, kw:kw + W, :] for kh in range(3) for kw in range(3)]
    patches = jnp.stack(taps, axis=3)            # (N, H, W, 9, C)
    return patches.reshape(N * H * W, 9 * C)


def upblock_forward(x1_nchw, x2_nchw, params):
    """JAX/Pallas equivalent of UpBlock.forward; NCHW in, NCHW out."""
    N, C1, H, W = x1_nchw.shape
    C2 = x2_nchw.shape[1]
    Cin = C1 + C2
    Cout = params["wu"].shape[-1]
    M = N * H * W

    x1 = jnp.transpose(x1_nchw, (0, 2, 3, 1))
    x2 = jnp.transpose(x2_nchw, (0, 2, 3, 1))
    x = jnp.concatenate([x2, x1], axis=-1).astype(jnp.bfloat16)  # cat([x2,x1], C)

    K1 = 9 * Cin
    K1p = _round_up(K1, 128)
    Cin_p = _round_up(Cin, 128)

    # ---- conv1: 3x3, Cin -> Cin (bias, no activation) ----------------------
    xcol = _pad2d(_im2col_3x3(x), M, K1p)
    w1 = _pad2d(params["w1"].reshape(K1, Cin).astype(jnp.bfloat16), K1p, Cin_p)
    b1 = _pad2d(params["b1"].astype(jnp.float32), 1, Cin_p)
    y1 = _tiled_matmul(xcol, w1, b1, relu=False, out_dtype=jnp.bfloat16)
    y1 = y1[:M, :Cin].reshape(N, H, W, Cin)

    # ---- conv2: 3x3, Cin -> Cin (bias, no activation) ----------------------
    ycol = _pad2d(_im2col_3x3(y1), M, K1p)
    w2 = _pad2d(params["w2"].reshape(K1, Cin).astype(jnp.bfloat16), K1p, Cin_p)
    b2 = _pad2d(params["b2"].astype(jnp.float32), 1, Cin_p)
    y2 = _tiled_matmul(ycol, w2, b2, relu=False, out_dtype=jnp.bfloat16)  # (Mp, Cin_p)

    # ---- BatchNorm (training-mode batch statistics over N*H*W) -------------
    gamma_p = _pad2d(params["gamma"].astype(jnp.float32), 1, Cin_p)
    beta_p = _pad2d(params["beta"].astype(jnp.float32), 1, Cin_p)
    s, ss = _bn_batch_stats(y2, M)
    mean = s / M
    var = jnp.maximum(ss / M - mean * mean, 0.0)
    inv = lax.rsqrt(var + 1e-5)
    scale = gamma_p * inv                     # padded channels: gamma=0 -> 0
    shift = beta_p - mean * scale

    # ---- up-conv: ConvTranspose2d(k=2, s=2) + ReLU, with BN+ReLU prologue ---
    Nup = 4 * Cout
    Nup_p = _round_up(Nup, 128)
    wu = jnp.transpose(params["wu"], (2, 0, 1, 3)).reshape(Cin, Nup)  # (Cin, dh*dw*Cout)
    wu = _pad2d(wu.astype(jnp.bfloat16), Cin_p, Nup_p)
    bu = _pad2d(jnp.tile(params["bu"].astype(jnp.float32), (1, 4)), 1, Nup_p)
    yup = _tiled_matmul(y2, wu, bu, relu=True, out_dtype=jnp.float32,
                        scale=scale, shift=shift)                     # (Mp, Nup_p)

    # ---- 2x2 pixel interleave + NCHW in a single fused transpose -----------
    yup = yup[:M, :Nup].reshape(N, H, W, 2, 2, Cout)   # (n, h, w, dh, dw, c)
    out = jnp.transpose(yup, (0, 5, 1, 3, 2, 4)).reshape(N, Cout, 2 * H, 2 * W)
    return out


# ---------------------------- pure-JAX reference -----------------------------

def _reference_forward(x1_nchw, x2_nchw, p):
    x1 = jnp.transpose(x1_nchw, (0, 2, 3, 1))
    x2 = jnp.transpose(x2_nchw, (0, 2, 3, 1))
    x = jnp.concatenate([x2, x1], axis=-1)
    dn = lax.conv_dimension_numbers(x.shape, p["w1"].shape, ("NHWC", "HWIO", "NHWC"))
    y = lax.conv_general_dilated(x, p["w1"], (1, 1), "SAME", dimension_numbers=dn,
                                 precision=lax.Precision.HIGHEST) + p["b1"][0]
    y = lax.conv_general_dilated(y, p["w2"], (1, 1), "SAME", dimension_numbers=dn,
                                 precision=lax.Precision.HIGHEST) + p["b2"][0]
    mean = jnp.mean(y, axis=(0, 1, 2), keepdims=True)
    var = jnp.mean((y - mean) ** 2, axis=(0, 1, 2), keepdims=True)
    y = (y - mean) * lax.rsqrt(var + 1e-5) * p["gamma"][0] + p["beta"][0]
    y = jnp.maximum(y, 0.0)
    N, H, W, _ = y.shape
    Cout = p["wu"].shape[-1]
    up = jnp.einsum("nhwc,uvcd->nhuwvd", y, p["wu"], precision=lax.Precision.HIGHEST)
    up = up.reshape(N, 2 * H, 2 * W, Cout) + p["bu"][0]
    up = jnp.maximum(up, 0.0)
    return jnp.transpose(up, (0, 3, 1, 2))


# -------------------------------- param init ---------------------------------

def init_params(key, in_channels, out_channels):
    ks = jax.random.split(key, 8)

    def nrm(k, shape, scale=0.1):
        return scale * jax.random.normal(k, shape, dtype=jnp.float32)

    return {
        "w1": nrm(ks[0], (3, 3, in_channels, in_channels)),
        "b1": nrm(ks[1], (1, in_channels)),
        "w2": nrm(ks[2], (3, 3, in_channels, in_channels)),
        "b2": nrm(ks[3], (1, in_channels)),
        "gamma": 1.0 + nrm(ks[4], (1, in_channels)),
        "beta": nrm(ks[5], (1, in_channels)),
        "wu": nrm(ks[6], (2, 2, in_channels, out_channels)),
        "bu": nrm(ks[7], (1, out_channels)),
    }


if __name__ == "__main__":
    key = jax.random.PRNGKey(0)
    k1, k2, kp = jax.random.split(key, 3)

    B, C1, C2, H, W = 2, 4, 4, 16, 16
    in_channels, out_channels = C1 + C2, 4

    x1 = jax.random.normal(k1, (B, C1, H, W), dtype=jnp.float32)
    x2 = jax.random.normal(k2, (B, C2, H, W), dtype=jnp.float32)
    params = init_params(kp, in_channels, out_channels)

    fwd = jax.jit(upblock_forward)
    out = jax.block_until_ready(fwd(x1, x2, params))
    assert out.shape == (B, out_channels, 2 * H, 2 * W), out.shape

    ref = jax.block_until_ready(_reference_forward(x1, x2, params))
    max_err = float(jnp.max(jnp.abs(out - ref)))
    assert max_err < 5e-2, f"max abs err {max_err}"

    print("KERNEL_OK")
</pallas_src>

<mosaic_0001>
module attributes {stable_mosaic.version = 11 : i64} {
  func.func @_matmul_kernel(%arg0: i32, %arg1: i32, %arg2: i32, %arg3: memref<256x128xbf16, #tpu.memory_space<vmem>>, %arg4: memref<128x128xbf16, #tpu.memory_space<vmem>>, %arg5: memref<1x128xf32, #tpu.memory_space<vmem>>, %arg6: memref<256x128xbf16, #tpu.memory_space<vmem>>, %arg7: memref<256x128xf32, #tpu.memory_space<vmem>>) attributes {dimension_semantics = [#tpu.dimension_semantics<parallel>, #tpu.dimension_semantics<parallel>, #tpu.dimension_semantics<arbitrary>], iteration_bounds = array<i64: 2, 1, 1>, scalar_prefetch = 0 : i64, scratch_operands = 1 : i64, tpu.core_type = #tpu.core_type<tc>, window_params = [{transform_indices = @transform_0, window_bounds = array<i64: 256, 128>}, {transform_indices = @transform_1, window_bounds = array<i64: 128, 128>}, {transform_indices = @transform_2, window_bounds = array<i64: 1, 128>}, {transform_indices = @transform_3, window_bounds = array<i64: 256, 128>}]} {
    %c0_i32 = arith.constant 0 : i32
    %0 = arith.cmpi eq, %arg2, %c0_i32 : i32
    %1 = arith.extui %0 : i1 to i32
    %c0_i32_0 = arith.constant 0 : i32
    %2 = arith.cmpi ne, %1, %c0_i32_0 : i32
    scf.if %2 {
      %cst_10 = arith.constant 0.000000e+00 : f32
      %12 = vector.broadcast %cst_10 : f32 to vector<256x128xf32>
      %c0_11 = arith.constant 0 : index
      %c0_12 = arith.constant 0 : index
      %13 = vector.load %arg7[%c0_11, %c0_12] : memref<256x128xf32, #tpu.memory_space<vmem>>, vector<256x128xf32>
      tpu.vector_store %arg7[%c0_11, %c0_12], %12 {strides = array<i32>} : memref<256x128xf32, #tpu.memory_space<vmem>>, vector<256x128xf32>,
    } else {
    }
    %c0 = arith.constant 0 : index
    %c0_1 = arith.constant 0 : index
    %3 = vector.load %arg3[%c0, %c0_1] : memref<256x128xbf16, #tpu.memory_space<vmem>>, vector<256x128xbf16>
    %c0_2 = arith.constant 0 : index
    %c0_3 = arith.constant 0 : index
    %4 = vector.load %arg7[%c0_2, %c0_3] : memref<256x128xf32, #tpu.memory_space<vmem>>, vector<256x128xf32>
    %c0_4 = arith.constant 0 : index
    %c0_5 = arith.constant 0 : index
    %5 = vector.load %arg4[%c0_4, %c0_5] : memref<128x128xbf16, #tpu.memory_space<vmem>>, vector<128x128xbf16>
    %cst = arith.constant dense<0.000000e+00> : vector<256x128xf32>
    %6 = tpu.matmul %3, %5, %cst {dimension_numbers = #tpu.dot_dimension_numbers<[1], [0], [0], [1], [0, 0, 1, 1], [], []>} : vector<256x128xbf16>, vector<128x128xbf16>, vector<256x128xf32> -> vector<256x128xf32>
    %7 = arith.addf %4, %6 : vector<256x128xf32>
    %c0_6 = arith.constant 0 : index
    %c0_7 = arith.constant 0 : index
    %8 = vector.load %arg7[%c0_6, %c0_7] : memref<256x128xf32, #tpu.memory_space<vmem>>, vector<256x128xf32>
    tpu.vector_store %arg7[%c0_6, %c0_7], %7 {strides = array<i32>} : memref<256x128xf32, #tpu.memory_space<vmem>>, vector<256x128xf32>,
    %c0_i32_8 = arith.constant 0 : i32
    %9 = arith.cmpi eq, %arg2, %c0_i32_8 : i32
    %10 = arith.extui %9 : i1 to i32
    %c0_i32_9 = arith.constant 0 : i32
    %11 = arith.cmpi ne, %10, %c0_i32_9 : i32
    scf.if %11 {
      %c0_10 = arith.constant 0 : index
      %c0_11 = arith.constant 0 : index
      %12 = vector.load %arg7[%c0_10, %c0_11] : memref<256x128xf32, #tpu.memory_space<vmem>>, vector<256x128xf32>
      %c0_12 = arith.constant 0 : index
      %c0_13 = arith.constant 0 : index
      %13 = vector.load %arg5[%c0_12, %c0_13] : memref<1x128xf32, #tpu.memory_space<vmem>>, vector<1x128xf32>
      %14 = vector.broadcast %13 : vector<1x128xf32> to vector<256x128xf32>
      %15 = arith.addf %12, %14 : vector<256x128xf32>
      %16 = arith.truncf %15 : vector<256x128xf32> to vector<256x128xbf16>
      %c0_14 = arith.constant 0 : index
      %c0_15 = arith.constant 0 : index
      %17 = vector.load %arg6[%c0_14, %c0_15] : memref<256x128xbf16, #tpu.memory_space<vmem>>, vector<256x128xbf16>
      tpu.vector_store %arg6[%c0_14, %c0_15], %16 {strides = array<i32>} : memref<256x128xbf16, #tpu.memory_space<vmem>>, vector<256x128xbf16>,
    } else {
    }
    return
  }
  func.func @transform_0(%arg0: i32, %arg1: i32, %arg2: i32) -> (i32, i32) {
    %c0_i32 = arith.constant 0 : i32
    return %arg0, %arg2 : i32, i32
  }
  func.func @transform_1(%arg0: i32, %arg1: i32, %arg2: i32) -> (i32, i32) {
    %c0_i32 = arith.constant 0 : i32
    return %arg2, %arg1 : i32, i32
  }
  func.func @transform_2(%arg0: i32, %arg1: i32, %arg2: i32) -> (i32, i32) {
    %c0_i32 = arith.constant 0 : i32
    %c0_i32_0 = arith.constant 0 : i32
    return %c0_i32, %arg1 : i32, i32
  }
  func.func @transform_3(%arg0: i32, %arg1: i32, %arg2: i32) -> (i32, i32) {
    %c0_i32 = arith.constant 0 : i32
    return %arg0, %arg1 : i32, i32
  }
}

module attributes {stable_mosaic.version = 11 : i64} {
  func.func @_bn_stats_kernel(%arg0: i32, %arg1: memref<512x128xbf16, #tpu.memory_space<vmem>>, %arg2: memref<1x128xf32, #tpu.memory_space<vmem>>, %arg3: memref<1x128xf32, #tpu.memory_space<vmem>>) attributes {dimension_semantics = [#tpu.dimension_semantics<arbitrary>], iteration_bounds = array<i64: 1>, scalar_prefetch = 0 : i64, scratch_operands = 0 : i64, tpu.core_type = #tpu.core_type<tc>, window_params = [{transform_indices = @transform_0, window_bounds = array<i64: 512, 128>}, {pipeline_mode = #tpu.pipeline_mode<synchronous>, transform_indices = @transform_1, window_bounds = array<i64: 1, 128>}, {pipeline_mode = #tpu.pipeline_mode<synchronous>, transform_indices = @transform_2, window_bounds = array<i64: 1, 128>}]} {
    %c0_i32 = arith.constant 0 : i32
    %0 = arith.cmpi eq, %arg0, %c0_i32 : i32
    %1 = arith.extui %0 : i1 to i32
    %c0_i32_0 = arith.constant 0 : i32
    %2 = arith.cmpi ne, %1, %c0_i32_0 : i32
    scf.if %2 {
      %cst_13 = arith.constant 0.000000e+00 : f32
      %24 = vector.broadcast %cst_13 : f32 to vector<1x128xf32>
      %c0_14 = arith.constant 0 : index
      %c0_15 = arith.constant 0 : index
      %25 = vector.load %arg2[%c0_14, %c0_15] : memref<1x128xf32, #tpu.memory_space<vmem>>, vector<1x128xf32>
      tpu.vector_store %arg2[%c0_14, %c0_15], %24 {strides = array<i32>} : memref<1x128xf32, #tpu.memory_space<vmem>>, vector<1x128xf32>,
      %cst_16 = arith.constant 0.000000e+00 : f32
      %26 = vector.broadcast %cst_16 : f32 to vector<1x128xf32>
      %c0_17 = arith.constant 0 : index
      %c0_18 = arith.constant 0 : index
      %27 = vector.load %arg3[%c0_17, %c0_18] : memref<1x128xf32, #tpu.memory_space<vmem>>, vector<1x128xf32>
      tpu.vector_store %arg3[%c0_17, %c0_18], %26 {strides = array<i32>} : memref<1x128xf32, #tpu.memory_space<vmem>>, vector<1x128xf32>,
    } else {
    }
    %c0 = arith.constant 0 : index
    %c0_1 = arith.constant 0 : index
    %3 = vector.load %arg1[%c0, %c0_1] : memref<512x128xbf16, #tpu.memory_space<vmem>>, vector<512x128xbf16>
    %4 = arith.extf %3 : vector<512x128xbf16> to vector<512x128xf32>
    %c512_i32 = arith.constant 512 : i32
    %5 = arith.muli %arg0, %c512_i32 : i32
    %6 = tpu.iota {dimensions = array<i32: 0>} : vector<512x128xi32>
    %7 = vector.broadcast %5 : i32 to vector<512x128xi32>
    %8 = arith.addi %7, %6 : vector<512x128xi32>
    %c512_i32_2 = arith.constant 512 : i32
    %9 = vector.broadcast %c512_i32_2 : i32 to vector<512x128xi32>
    %10 = arith.cmpi slt, %8, %9 : vector<512x128xi32>
    %cst = arith.constant 0.000000e+00 : f32
    %11 = vector.broadcast %cst : f32 to vector<512x128xf32>
    %12 = arith.select %10, %4, %11 : vector<512x128xi1>, vector<512x128xf32>
    %c0_3 = arith.constant 0 : index
    %c0_4 = arith.constant 0 : index
    %13 = vector.load %arg2[%c0_3, %c0_4] : memref<1x128xf32, #tpu.memory_space<vmem>>, vector<1x128xf32>
    %cst_5 = arith.constant dense<0.000000e+00> : vector<128xf32>
    %14 = vector.multi_reduction <add>, %12, %cst_5 [0] : vector<512x128xf32> to vector<128xf32>
    %15 = vector.shape_cast %14 : vector<128xf32> to vector<1x128xf32>
    %16 = arith.addf %13, %15 : vector<1x128xf32>
    %c0_6 = arith.constant 0 : index
    %c0_7 = arith.constant 0 : index
    %17 = vector.load %arg2[%c0_6, %c0_7] : memref<1x128xf32, #tpu.memory_space<vmem>>, vector<1x128xf32>
    tpu.vector_store %arg2[%c0_6, %c0_7], %16 {strides = array<i32>} : memref<1x128xf32, #tpu.memory_space<vmem>>, vector<1x128xf32>,
    %c0_8 = arith.constant 0 : index
    %c0_9 = arith.constant 0 : index
    %18 = vector.load %arg3[%c0_8, %c0_9] : memref<1x128xf32, #tpu.memory_space<vmem>>, vector<1x128xf32>
    %19 = arith.mulf %12, %12 : vector<512x128xf32>
    %cst_10 = arith.constant dense<0.000000e+00> : vector<128xf32>
    %20 = vector.multi_reduction <add>, %19, %cst_10 [0] : vector<512x128xf32> to vector<128xf32>
    %21 = vector.shape_cast %20 : vector<128xf32> to vector<1x128xf32>
    %22 = arith.addf %18, %21 : vector<1x128xf32>
    %c0_11 = arith.constant 0 : index
    %c0_12 = arith.constant 0 : index
    %23 = vector.load %arg3[%c0_11, %c0_12] : memref<1x128xf32, #tpu.memory_space<vmem>>, vector<1x128xf32>
    tpu.vector_store %arg3[%c0_11, %c0_12], %22 {strides = array<i32>} : memref<1x128xf32, #tpu.memory_space<vmem>>, vector<1x128xf32>,
    return
  }
  func.func @transform_0(%arg0: i32) -> (i32, i32) {
    %c0_i32 = arith.constant 0 : i32
    %c0_i32_0 = arith.constant 0 : i32
    return %arg0, %c0_i32 : i32, i32
  }
  func.func @transform_1(%arg0: i32) -> (i32, i32) {
    %c0_i32 = arith.constant 0 : i32
    %c0_i32_0 = arith.constant 0 : i32
    %c0_i32_1 = arith.constant 0 : i32
    return %c0_i32, %c0_i32_0 : i32, i32
  }
  func.func @transform_2(%arg0: i32) -> (i32, i32) {
    %c0_i32 = arith.constant 0 : i32
    %c0_i32_0 = arith.constant 0 : i32
    %c0_i32_1 = arith.constant 0 : i32
    return %c0_i32, %c0_i32_0 : i32, i32
  }
}

module attributes {stable_mosaic.version = 11 : i64} {
  func.func @_matmul_kernel(%arg0: i32, %arg1: i32, %arg2: i32, %arg3: memref<256x128xbf16, #tpu.memory_space<vmem>>, %arg4: memref<128x128xbf16, #tpu.memory_space<vmem>>, %arg5: memref<1x128xf32, #tpu.memory_space<vmem>>, %arg6: memref<1x128xf32, #tpu.memory_space<vmem>>, %arg7: memref<1x128xf32, #tpu.memory_space<vmem>>, %arg8: memref<256x128xf32, #tpu.memory_space<vmem>>, %arg9: memref<256x128xf32, #tpu.memory_space<vmem>>) attributes {dimension_semantics = [#tpu.dimension_semantics<parallel>, #tpu.dimension_semantics<parallel>, #tpu.dimension_semantics<arbitrary>], iteration_bounds = array<i64: 2, 1, 1>, scalar_prefetch = 0 : i64, scratch_operands = 1 : i64, tpu.core_type = #tpu.core_type<tc>, window_params = [{transform_indices = @transform_0, window_bounds = array<i64: 256, 128>}, {transform_indices = @transform_1, window_bounds = array<i64: 128, 128>}, {transform_indices = @transform_2, window_bounds = array<i64: 1, 128>}, {transform_indices = @transform_3, window_bounds = array<i64: 1, 128>}, {transform_indices = @transform_4, window_bounds = array<i64: 1, 128>}, {transform_indices = @transform_5, window_bounds = array<i64: 256, 128>}]} {
    %c0_i32 = arith.constant 0 : i32
    %0 = arith.cmpi eq, %arg2, %c0_i32 : i32
    %1 = arith.extui %0 : i1 to i32
    %c0_i32_0 = arith.constant 0 : i32
    %2 = arith.cmpi ne, %1, %c0_i32_0 : i32
    scf.if %2 {
      %cst_15 = arith.constant 0.000000e+00 : f32
      %22 = vector.broadcast %cst_15 : f32 to vector<256x128xf32>
      %c0_16 = arith.constant 0 : index
      %c0_17 = arith.constant 0 : index
      %23 = vector.load %arg9[%c0_16, %c0_17] : memref<256x128xf32, #tpu.memory_space<vmem>>, vector<256x128xf32>
      tpu.vector_store %arg9[%c0_16, %c0_17], %22 {strides = array<i32>} : memref<256x128xf32, #tpu.memory_space<vmem>>, vector<256x128xf32>,
    } else {
    }
    %c0 = arith.constant 0 : index
    %c0_1 = arith.constant 0 : index
    %3 = vector.load %arg3[%c0, %c0_1] : memref<256x128xbf16, #tpu.memory_space<vmem>>, vector<256x128xbf16>
    %4 = arith.extf %3 : vector<256x128xbf16> to vector<256x128xf32>
    %c0_2 = arith.constant 0 : index
    %c0_3 = arith.constant 0 : index
    %5 = vector.load %arg6[%c0_2, %c0_3] : memref<1x128xf32, #tpu.memory_space<vmem>>, vector<1x128xf32>
    %6 = vector.broadcast %5 : vector<1x128xf32> to vector<256x128xf32>
    %7 = arith.mulf %4, %6 : vector<256x128xf32>
    %c0_4 = arith.constant 0 : index
    %c0_5 = arith.constant 0 : index
    %8 = vector.load %arg7[%c0_4, %c0_5] : memref<1x128xf32, #tpu.memory_space<vmem>>, vector<1x128xf32>
    %9 = vector.broadcast %8 : vector<1x128xf32> to vector<256x128xf32>
    %10 = arith.addf %7, %9 : vector<256x128xf32>
    %cst = arith.constant 0.000000e+00 : f32
    %11 = vector.broadcast %cst : f32 to vector<256x128xf32>
    %12 = arith.maximumf %10, %11 : vector<256x128xf32>
    %13 = arith.truncf %12 : vector<256x128xf32> to vector<256x128xbf16>
    %c0_6 = arith.constant 0 : index
    %c0_7 = arith.constant 0 : index
    %14 = vector.load %arg9[%c0_6, %c0_7] : memref<256x128xf32, #tpu.memory_space<vmem>>, vector<256x128xf32>
    %c0_8 = arith.constant 0 : index
    %c0_9 = arith.constant 0 : index
    %15 = vector.load %arg4[%c0_8, %c0_9] : memref<128x128xbf16, #tpu.memory_space<vmem>>, vector<128x128xbf16>
    %cst_10 = arith.constant dense<0.000000e+00> : vector<256x128xf32>
    %16 = tpu.matmul %13, %15, %cst_10 {dimension_numbers = #tpu.dot_dimension_numbers<[1], [0], [0], [1], [0, 0, 1, 1], [], []>} : vector<256x128xbf16>, vector<128x128xbf16>, vector<256x128xf32> -> vector<256x128xf32>
    %17 = arith.addf %14, %16 : vector<256x128xf32>
    %c0_11 = arith.constant 0 : index
    %c0_12 = arith.constant 0 : index
    %18 = vector.load %arg9[%c0_11, %c0_12] : memref<256x128xf32, #tpu.memory_space<vmem>>, vector<256x128xf32>
    tpu.vector_store %arg9[%c0_11, %c0_12], %17 {strides = array<i32>} : memref<256x128xf32, #tpu.memory_space<vmem>>, vector<256x128xf32>,
    %c0_i32_13 = arith.constant 0 : i32
    %19 = arith.cmpi eq, %arg2, %c0_i32_13 : i32
    %20 = arith.extui %19 : i1 to i32
    %c0_i32_14 = arith.constant 0 : i32
    %21 = arith.cmpi ne, %20, %c0_i32_14 : i32
    scf.if %21 {
      %c0_15 = arith.constant 0 : index
      %c0_16 = arith.constant 0 : index
      %22 = vector.load %arg9[%c0_15, %c0_16] : memref<256x128xf32, #tpu.memory_space<vmem>>, vector<256x128xf32>
      %c0_17 = arith.constant 0 : index
      %c0_18 = arith.constant 0 : index
      %23 = vector.load %arg5[%c0_17, %c0_18] : memref<1x128xf32, #tpu.memory_space<vmem>>, vector<1x128xf32>
      %24 = vector.broadcast %23 : vector<1x128xf32> to vector<256x128xf32>
      %25 = arith.addf %22, %24 : vector<256x128xf32>
      %cst_19 = arith.constant 0.000000e+00 : f32
      %26 = vector.broadcast %cst_19 : f32 to vector<256x128xf32>
      %27 = arith.maximumf %25, %26 : vector<256x128xf32>
      %c0_20 = arith.constant 0 : index
      %c0_21 = arith.constant 0 : index
      %28 = vector.load %arg8[%c0_20, %c0_21] : memref<256x128xf32, #tpu.memory_space<vmem>>, vector<256x128xf32>
      tpu.vector_store %arg8[%c0_20, %c0_21], %27 {strides = array<i32>} : memref<256x128xf32, #tpu.memory_space<vmem>>, vector<256x128xf32>,
    } else {
    }
    return
  }
  func.func @transform_0(%arg0: i32, %arg1: i32, %arg2: i32) -> (i32, i32) {
    %c0_i32 = arith.constant 0 : i32
    return %arg0, %arg2 : i32, i32
  }
  func.func @transform_1(%arg0: i32, %arg1: i32, %arg2: i32) -> (i32, i32) {
    %c0_i32 = arith.constant 0 : i32
    return %arg2, %arg1 : i32, i32
  }
  func.func @transform_2(%arg0: i32, %arg1: i32, %arg2: i32) -> (i32, i32) {
    %c0_i32 = arith.constant 0 : i32
    %c0_i32_0 = arith.constant 0 : i32
    return %c0_i32, %arg1 : i32, i32
  }
  func.func @transform_3(%arg0: i32, %arg1: i32, %arg2: i32) -> (i32, i32) {
    %c0_i32 = arith.constant 0 : i32
    %c0_i32_0 = arith.constant 0 : i32
    return %c0_i32, %arg2 : i32, i32
  }
  func.func @transform_4(%arg0: i32, %arg1: i32, %arg2: i32) -> (i32, i32) {
    %c0_i32 = arith.constant 0 : i32
    %c0_i32_0 = arith.constant 0 : i32
    return %c0_i32, %arg2 : i32, i32
  }
  func.func @transform_5(%arg0: i32, %arg1: i32, %arg2: i32) -> (i32, i32) {
    %c0_i32 = arith.constant 0 : i32
    return %arg0, %arg1 : i32, i32
  }
}

</mosaic_0001>

<llo_original>
// kernel: upblock_forward.4
$region0: #{upblock_forward.4}
  #allocation0 [shape = 'u32[]', space=smem, size = 0x4, offset = 0x4, fixed_abs, tag = 'smem constant byte address 0x4 - core index']
  #allocation1 [shape = 'u32[72,128]{1,0:T(1,128)}', space=vmem, size = 0x9000, scoped, tag = 'internal scratch']
  #allocation2 [shape = 'f32[256,128]{1,0:T(8,128)}', space=vmem, size = 0x20000, scoped, tag = 'scratch operand']
  %s0 = inlined_call_operand.vmem [shape: bf16[512,128], index: 0, kind: input, shape index: {}]
  %s1 = inlined_call_operand.vmem [shape: bf16[128,128], index: 1, kind: input, shape index: {}]
  %s2 = inlined_call_operand.vmem [shape: f32[1,128], index: 2, kind: input, shape index: {}]
  %s3 = inlined_call_operand.vmem [shape: bf16[512,128], index: 3, kind: output, shape index: {}]
  %s4 = sld [smem:[#allocation0]]
  $region53: #{upblock_forward.4} parent=0
    _
  %s6 = ssub.s32 1, %s4
  %s7 = scalar_select 0, %s6, %s4
  loop: start=0, step=1, limit=4
  $region2: #{upblock_forward.4} parent=0 // loop_pre_header
    _
  $region3: #{upblock_forward.4} parent=0 // loop_header
    %s9 = sphi 0, %s13
    %p10 = scmp.ge.s32.totalorder %s9, 4
    %s16 = sphi 0, %s35
    %s17 = sphi 0, %s31
    %s18 = sphi 0, %s27
    %s19 = sphi 0, %s16
    %s20 = sphi 0, %s17
    %s21 = sphi 0, %s18
    %s22 = sphi 0, %s19
    %s23 = sphi 0, %s20
    %s24 = sphi 0, %s21
    %s40 = sphi 0, %s42
    %s43 = sphi 0, %s40
    %s44 = sphi 0, %s43
    %s60 = sphi 0, %s44
    %s68 = sphi 0, %s70
    %s71 = sphi 0, %s68
    %s72 = sphi 0, %s71
    %s88 = sphi 0, %s72
    %s94 = sphi 0, %s96
    %s97 = sphi 0, %s94
    %s98 = sphi 0, %s97
    %s114 = sphi 0, %s98
    %s122 = sphi 0, %s124
    %s125 = sphi 0, %s122
    %s126 = sphi 0, %s125
    %s142 = sphi 0, %s126
  $region4: #{upblock_forward.4} parent=0 // loop_header_branch
    %12 = sbr.rel (%p10) target = $region8
  $region5: #{upblock_forward.4} parent=0 // loop_body
    %s14 = ssub.s32 %s9, 1
    %s15 = ssub.s32 %s9, 2
    %s25 = sadd.s32 1, %s18
    %p26 = scmp.ge.s32.totalorder %s25, 1
    %s27 = scalar_select %p26, 0, %s25
    %s28 = sadd.s32 1, %s17
    %s29 = scalar_select %p26, %s28, %s17
    %p30 = scmp.ge.s32.totalorder %s29, 1
    %s31 = scalar_select %p30, 0, %s29
    %s32 = sadd.s32 1, %s16
    %s33 = scalar_select %p30, %s32, %s16
    %p34 = scmp.ge.s32.totalorder %s33, 2
    %s35 = scalar_select %p34, 0, %s33
    %s36 = ssub.s32 %s16, %s35
    %s37 = ssub.s32 %s18, %s27
    %s38 = sor.u32 %s36, %s37
    %p39 = scmp.eq.s32.totalorder %s38, 0
    %s41 = sadd.s32 %s40, 1
    %s42 = scalar_select %p39, %s40, %s41
    %p45 = pneg %p39
    %p46 = scmp.eq.s32.totalorder %s9, 1
    %p47 = por %p45, %p46
    %p48 = scmp.ne.s32.totalorder %s40, %s43
    %p49 = scmp.eq.s32.totalorder %s9, 0
    %p50 = por %p48, %p49
    %p51 = scmp.ne.s32.totalorder %s40, %s43
    %p52 = scmp.eq.s32.totalorder %s14, 1
    %p53 = por %p51, %p52
    %p54 = scmp.ne.s32.totalorder %s43, %s44
    %p55 = scmp.eq.s32.totalorder %s14, 0
    %p56 = por %p54, %p55
    %p57 = scmp.ne.s32.totalorder %s43, %s44
    %p58 = scmp.eq.s32.totalorder %s15, 1
    %p59 = por %p57, %p58
    %p61 = scmp.ne.s32.totalorder %s44, %s60
    %p62 = scmp.eq.s32.totalorder %s15, 0
    %p63 = por %p61, %p62
    %s64 = ssub.s32 %s18, %s27
    %s65 = ssub.s32 %s17, %s31
    %s66 = sor.u32 %s64, %s65
    %p67 = scmp.eq.s32.totalorder %s66, 0
    %s69 = sadd.s32 %s68, 1
    %s70 = scalar_select %p67, %s68, %s69
    %p73 = pneg %p67
    %p74 = scmp.eq.s32.totalorder %s9, 1
    %p75 = por %p73, %p74
    %p76 = scmp.ne.s32.totalorder %s68, %s71
    %p77 = scmp.eq.s32.totalorder %s9, 0
    %p78 = por %p76, %p77
    %p79 = scmp.ne.s32.totalorder %s68, %s71
    %p80 = scmp.eq.s32.totalorder %s14, 1
    %p81 = por %p79, %p80
    %p82 = scmp.ne.s32.totalorder %s71, %s72
    %p83 = scmp.eq.s32.totalorder %s14, 0
    %p84 = por %p82, %p83
    %p85 = scmp.ne.s32.totalorder %s71, %s72
    %p86 = scmp.eq.s32.totalorder %s15, 1
    %p87 = por %p85, %p86
    %p89 = scmp.ne.s32.totalorder %s72, %s88
    %p90 = scmp.eq.s32.totalorder %s15, 0
    %p91 = por %p89, %p90
    %s92 = ssub.s32 %s17, %s31
    %p93 = scmp.eq.s32.totalorder %s92, 0
    %s95 = sadd.s32 %s94, 1
    %s96 = scalar_select %p93, %s94, %s95
    %p99 = pneg %p93
    %p100 = scmp.eq.s32.totalorder %s9, 1
    %p101 = por %p99, %p100
    %p102 = scmp.ne.s32.totalorder %s94, %s97
    %p103 = scmp.eq.s32.totalorder %s9, 0
    %p104 = por %p102, %p103
    %p105 = scmp.ne.s32.totalorder %s94, %s97
    %p106 = scmp.eq.s32.totalorder %s14, 1
    %p107 = por %p105, %p106
    %p108 = scmp.ne.s32.totalorder %s97, %s98
    %p109 = scmp.eq.s32.totalorder %s14, 0
    %p110 = por %p108, %p109
    %p111 = scmp.ne.s32.totalorder %s97, %s98
    %p112 = scmp.eq.s32.totalorder %s15, 1
    %p113 = por %p111, %p112
    %p115 = scmp.ne.s32.totalorder %s98, %s114
    %p116 = scmp.eq.s32.totalorder %s15, 0
    %p117 = por %p115, %p116
    %s118 = ssub.s32 %s16, %s35
    %s119 = ssub.s32 %s17, %s31
    %s120 = sor.u32 %s118, %s119
    %p121 = scmp.eq.s32.totalorder %s120, 0
    %s123 = sadd.s32 %s122, 1
    %s124 = scalar_select %p121, %s122, %s123
    %p127 = pneg %p121
    %p128 = scmp.eq.s32.totalorder %s9, 1
    %p129 = por %p127, %p128
    %p130 = scmp.ne.s32.totalorder %s122, %s125
    %p131 = scmp.eq.s32.totalorder %s9, 0
    %p132 = por %p130, %p131
    %p133 = scmp.ne.s32.totalorder %s122, %s125
    %p134 = scmp.eq.s32.totalorder %s14, 1
    %p135 = por %p133, %p134
    %p136 = scmp.ne.s32.totalorder %s125, %s126
    %p137 = scmp.eq.s32.totalorder %s14, 0
    %p138 = por %p136, %p137
    %p139 = scmp.ne.s32.totalorder %s125, %s126
    %p140 = scmp.eq.s32.totalorder %s15, 1
    %p141 = por %p139, %p140
    %p143 = scmp.ne.s32.totalorder %s126, %s142
    %p144 = scmp.eq.s32.totalorder %s15, 0
    %p145 = por %p143, %p144
    %p146 = scmp.le.s32.totalorder 1, %s9
    %p147 = scmp.lt.s32.totalorder %s9, 3
    %p148 = pnand %p146, %p147
    %p149 = pneg %p148
    // Predicated region
    $region9: #{upblock_forward.4} parent=5 // pred_check
      _
    $region10: #{upblock_forward.4} parent=5 // pred_check_branch
      %151 = sbr.rel (%p148) target = $region12
    $region11: #{upblock_forward.4} parent=5 // pred_region
      %s152 = ssub.s32 %s9, 1
      // Predicated region
      $region13: #{upblock_forward.4} parent=11 // pred_check
        %p153 = pneg %p84
      $region14: #{upblock_forward.4} parent=11 // pred_check_branch
        %155 = sbr.rel (%p153) target = $region16
      $region15: #{upblock_forward.4} parent=11 // pred_region
        %s156 = smul.u32 16, %s21
        %p157 = scmp.lt.s32.totalorder %s156, 15
        %s158 = scalar_select %p157, %s156, 15
        %p159 = scmp.lt.s32.totalorder %s20, 0
        %s160 = scalar_select %p159, %s20, 0
        %s161 = sadd.s32 %s160, %s158
        %s162 = smul.addr %s161, 4
        %s163 = scalar_lea.vmem %s1, %s162
        %s164 = smul.u32 16, %s21
      $region16: #{upblock_forward.4} parent=11 // pred_fallthru
        _
      // Predicated region
      $region17: #{upblock_forward.4} parent=11 // pred_check
        %p165 = pneg %p110
      $region18: #{upblock_forward.4} parent=11 // pred_check_branch
        %167 = sbr.rel (%p165) target = $region20
      $region19: #{upblock_forward.4} parent=11 // pred_region
        %p168 = scmp.lt.s32.totalorder %s20, 0
        %s169 = scalar_select %p168, %s20, 0
        %s170 = scalar_lea.vmem %s2, %s169
      $region20: #{upblock_forward.4} parent=11 // pred_fallthru
        _
    $region12: #{upblock_forward.4} parent=5 // pred_fallthru
      _
    %p171 = scmp.lt.s32.totalorder %s9, 2
    // Predicated region
    $region21: #{upblock_forward.4} parent=5 // pred_check
      %p172 = pneg %p171
    $region22: #{upblock_forward.4} parent=5 // pred_check_branch
      %174 = sbr.rel (%p172) target = $region24
    $region23: #{upblock_forward.4} parent=5 // pred_region
      // Predicated region
      $region25: #{upblock_forward.4} parent=23 // pred_check
        %p175 = pneg %p50
      $region26: #{upblock_forward.4} parent=23 // pred_check_branch
        %177 = sbr.rel (%p175) target = $region28
      $region27: #{upblock_forward.4} parent=23 // pred_region
        %s178 = smul.u32 32, %s16
        %p179 = scmp.lt.s32.totalorder %s178, 63
        %s180 = scalar_select %p179, %s178, 63
        %p181 = scmp.lt.s32.totalorder %s18, 0
        %s182 = scalar_select %p181, %s18, 0
        %s183 = sadd.s32 %s182, %s180
        %s184 = smul.addr %s183, 4
        %s185 = scalar_lea.vmem %s0, %s184
        %s186 = smul.u32 32, %s16
      $region28: #{upblock_forward.4} parent=23 // pred_fallthru
        _
    $region24: #{upblock_forward.4} parent=5 // pred_fallthru
      _
    %p187 = scmp.le.s32.totalorder 1, %s9
    %p188 = scmp.lt.s32.totalorder %s9, 3
    %p189 = pnand %p187, %p188
    %p190 = pneg %p189
    // Predicated region
    $region29: #{upblock_forward.4} parent=5 // pred_check
      _
    $region30: #{upblock_forward.4} parent=5 // pred_check_branch
      %192 = sbr.rel (%p189) target = $region32
    $region31: #{upblock_forward.4} parent=5 // pred_region
      %s193 = ssub.s32 %s9, 1
      %s194 = smul.u32 32, %s19
      %p195 = scmp.lt.s32.totalorder %s194, 63
      %s196 = scalar_select %p195, %s194, 63
      %p197 = scmp.lt.s32.totalorder %s21, 0
      %s198 = scalar_select %p197, %s21, 0
      %s199 = sadd.s32 %s198, %s196
      %s200 = smul.addr %s199, 4
      %s201 = scalar_lea.vmem %s0, %s200
      %p202 = pneg %p56
      %p203 = pneg %p53
      %s204 = smul.u32 16, %s21
      %p205 = scmp.lt.s32.totalorder %s204, 15
      %s206 = scalar_select %p205, %s204, 15
      %p207 = scmp.lt.s32.totalorder %s20, 0
      %s208 = scalar_select %p207, %s20, 0
      %s209 = sadd.s32 %s208, %s206
      %s210 = smul.addr %s209, 4
      %s211 = scalar_lea.vmem %s1, %s210
      %p212 = pneg %p84
      %p213 = pneg %p81
      %p214 = scmp.lt.s32.totalorder %s20, 0
      %s215 = scalar_select %p214, %s20, 0
      %s216 = scalar_lea.vmem %s2, %s215
      %p217 = pneg %p110
      %p218 = pneg %p107
      %p219 = pneg %p138
      %p220 = pneg %p135
      %s221 = smul.u32 32, %s19
      %p222 = scmp.lt.s32.totalorder %s221, 63
      %s223 = scalar_select %p222, %s221, 63
      %p224 = scmp.lt.s32.totalorder %s20, 0
      %s225 = scalar_select %p224, %s20, 0
      %s226 = sadd.s32 %s225, %s223
      %s227 = smul.addr %s226, 4
      %s228 = scalar_lea.vmem %s3, %s227
      %s229 = smul.u32 32, %s19
      %p230 = scmp.lt.s32.totalorder %s229, 63
      %s231 = scalar_select %p230, %s229, 63
      %p232 = scmp.lt.s32.totalorder %s21, 0
      %s233 = scalar_select %p232, %s21, 0
      %s234 = sadd.s32 %s233, %s231
      %s235 = smul.addr %s234, 4
      %s236 = scalar_lea.vmem %s0, %s235
      %s237 = smul.u32 32, %s19
      %s238 = smul.u32 16, %s21
      %p239 = scmp.lt.s32.totalorder %s238, 15
      %s240 = scalar_select %p239, %s238, 15
      %p241 = scmp.lt.s32.totalorder %s20, 0
      %s242 = scalar_select %p241, %s20, 0
      %s243 = sadd.s32 %s242, %s240
      %s244 = smul.addr %s243, 4
      %s245 = scalar_lea.vmem %s1, %s244
      %s246 = smul.u32 16, %s21
      %p247 = scmp.lt.s32.totalorder %s20, 0
      %s248 = scalar_select %p247, %s20, 0
      %s249 = scalar_lea.vmem %s2, %s248
      %s250 = smul.u32 32, %s19
      %p251 = scmp.lt.s32.totalorder %s250, 63
      %s252 = scalar_select %p251, %s250, 63
      %p253 = scmp.lt.s32.totalorder %s20, 0
      %s254 = scalar_select %p253, %s20, 0
      %s255 = sadd.s32 %s254, %s252
      %s256 = smul.addr %s255, 4
      %s257 = scalar_lea.vmem %s3, %s256
      %s258 = smul.u32 32, %s19
      %p259 = scmp.eq.s32.totalorder %s21, 0
      // Predicated region
      $region33: #{upblock_forward.4} parent=31 // pred_check
        %p260 = pneg %p259
      $region34: #{upblock_forward.4} parent=31 // pred_check_branch
        %262 = sbr.rel (%p260) target = $region36
      $region35: #{upblock_forward.4} parent=31 // pred_region
        %263 = vst [vmem:[#allocation2] sm:$0xff] 0.0
        %264 = vst [vmem:[#allocation2 + $0x8] sm:$0xff] 0.0
        %265 = vst [vmem:[#allocation2 + $0x10] sm:$0xff] 0.0
        %266 = vst [vmem:[#allocation2 + $0x18] sm:$0xff] 0.0
        %267 = vst [vmem:[#allocation2 + $0x20] sm:$0xff] 0.0
        %268 = vst [vmem:[#allocation2 + $0x28] sm:$0xff] 0.0
        %269 = vst [vmem:[#allocation2 + $0x30] sm:$0xff] 0.0
        %270 = vst [vmem:[#allocation2 + $0x38] sm:$0xff] 0.0
        %271 = vst [vmem:[#allocation2 + $0x40] sm:$0xff] 0.0
        %272 = vst [vmem:[#allocation2 + $0x48] sm:$0xff] 0.0
        %273 = vst [vmem:[#allocation2 + $0x50] sm:$0xff] 0.0
        %274 = vst [vmem:[#allocation2 + $0x58] sm:$0xff] 0.0
        %275 = vst [vmem:[#allocation2 + $0x60] sm:$0xff] 0.0
        %276 = vst [vmem:[#allocation2 + $0x68] sm:$0xff] 0.0
        %277 = vst [vmem:[#allocation2 + $0x70] sm:$0xff] 0.0
        %278 = vst [vmem:[#allocation2 + $0x78] sm:$0xff] 0.0
        %279 = vst [vmem:[#allocation2 + $0x80] sm:$0xff] 0.0
        %280 = vst [vmem:[#allocation2 + $0x88] sm:$0xff] 0.0
        %281 = vst [vmem:[#allocation2 + $0x90] sm:$0xff] 0.0
        %282 = vst [vmem:[#allocation2 + $0x98] sm:$0xff] 0.0
        %283 = vst [vmem:[#allocation2 + $0xa0] sm:$0xff] 0.0
        %284 = vst [vmem:[#allocation2 + $0xa8] sm:$0xff] 0.0
        %285 = vst [vmem:[#allocation2 + $0xb0] sm:$0xff] 0.0
        %286 = vst [vmem:[#allocation2 + $0xb8] sm:$0xff] 0.0
        %287 = vst [vmem:[#allocation2 + $0xc0] sm:$0xff] 0.0
        %288 = vst [vmem:[#allocation2 + $0xc8] sm:$0xff] 0.0
        %289 = vst [vmem:[#allocation2 + $0xd0] sm:$0xff] 0.0
        %290 = vst [vmem:[#allocation2 + $0xd8] sm:$0xff] 0.0
        %291 = vst [vmem:[#allocation2 + $0xe0] sm:$0xff] 0.0
        %292 = vst [vmem:[#allocation2 + $0xe8] sm:$0xff] 0.0
        %293 = vst [vmem:[#allocation2 + $0xf0] sm:$0xff] 0.0
        %294 = vst [vmem:[#allocation2 + $0xf8] sm:$0xff] 0.0
      $region36: #{upblock_forward.4} parent=31 // pred_fallthru
        _
      %v295 = vld [vmem:[%s236] sm:$0xf]
      %v296 = vld [vmem:[%s236 + $0x4] sm:$0xf]
      %v297 = vld [vmem:[%s236 + $0x8] sm:$0xf]
      %v298 = vld [vmem:[%s236 + $0xc] sm:$0xf]
      %v299 = vld [vmem:[%s236 + $0x10] sm:$0xf]
      %v300 = vld [vmem:[%s236 + $0x14] sm:$0xf]
      %v301 = vld [vmem:[%s236 + $0x18] sm:$0xf]
      %v302 = vld [vmem:[%s236 + $0x1c] sm:$0xf]
      %v303 = vld [vmem:[%s236 + $0x20] sm:$0xf]
      %v304 = vld [vmem:[%s236 + $0x24] sm:$0xf]
      %v305 = vld [vmem:[%s236 + $0x28] sm:$0xf]
      %v306 = vld [vmem:[%s236 + $0x2c] sm:$0xf]
      %v307 = vld [vmem:[%s236 + $0x30] sm:$0xf]
      %v308 = vld [vmem:[%s236 + $0x34] sm:$0xf]
      %v309 = vld [vmem:[%s236 + $0x38] sm:$0xf]
      %v310 = vld [vmem:[%s236 + $0x3c] sm:$0xf]
      %v311 = vld [vmem:[%s236 + $0x40] sm:$0xf]
      %v312 = vld [vmem:[%s236 + $0x44] sm:$0xf]
      %v313 = vld [vmem:[%s236 + $0x48] sm:$0xf]
      %v314 = vld [vmem:[%s236 + $0x4c] sm:$0xf]
      %v315 = vld [vmem:[%s236 + $0x50] sm:$0xf]
      %v316 = vld [vmem:[%s236 + $0x54] sm:$0xf]
      %v317 = vld [vmem:[%s236 + $0x58] sm:$0xf]
      %v318 = vld [vmem:[%s236 + $0x5c] sm:$0xf]
      %v319 = vld [vmem:[%s236 + $0x60] sm:$0xf]
      %v320 = vld [vmem:[%s236 + $0x64] sm:$0xf]
      %v321 = vld [vmem:[%s236 + $0x68] sm:$0xf]
      %v322 = vld [vmem:[%s236 + $0x6c] sm:$0xf]
      %v323 = vld [vmem:[%s236 + $0x70] sm:$0xf]
      %v324 = vld [vmem:[%s236 + $0x74] sm:$0xf]
      %v325 = vld [vmem:[%s236 + $0x78] sm:$0xf]
      %v326 = vld [vmem:[%s236 + $0x7c] sm:$0xf]
      %v327 = vld [vmem:[#allocation2] sm:$0xff]
      %v328 = vld [vmem:[#allocation2 + $0x8] sm:$0xff]
      %v329 = vld [vmem:[#allocation2 + $0x10] sm:$0xff]
      %v330 = vld [vmem:[#allocation2 + $0x18] sm:$0xff]
      %v331 = vld [vmem:[#allocation2 + $0x20] sm:$0xff]
      %v332 = vld [vmem:[#allocation2 + $0x28] sm:$0xff]
      %v333 = vld [vmem:[#allocation2 + $0x30] sm:$0xff]
      %v334 = vld [vmem:[#allocation2 + $0x38] sm:$0xff]
      %v335 = vld [vmem:[#allocation2 + $0x40] sm:$0xff]
      %v336 = vld [vmem:[#allocation2 + $0x48] sm:$0xff]
      %v337 = vld [vmem:[#allocation2 + $0x50] sm:$0xff]
      %v338 = vld [vmem:[#allocation2 + $0x58] sm:$0xff]
      %v339 = vld [vmem:[#allocation2 + $0x60] sm:$0xff]
      %v340 = vld [vmem:[#allocation2 + $0x68] sm:$0xff]
      %v341 = vld [vmem:[#allocation2 + $0x70] sm:$0xff]
      %v342 = vld [vmem:[#allocation2 + $0x78] sm:$0xff]
      %v343 = vld [vmem:[#allocation2 + $0x80] sm:$0xff]
      %v344 = vld [vmem:[#allocation2 + $0x88] sm:$0xff]
      %v345 = vld [vmem:[#allocation2 + $0x90] sm:$0xff]
      %v346 = vld [vmem:[#allocation2 + $0x98] sm:$0xff]
      %v347 = vld [vmem:[#allocation2 + $0xa0] sm:$0xff]
      %v348 = vld [vmem:[#allocation2 + $0xa8] sm:$0xff]
      %v349 = vld [vmem:[#allocation2 + $0xb0] sm:$0xff]
      %v350 = vld [vmem:[#allocation2 + $0xb8] sm:$0xff]
      %v351 = vld [vmem:[#allocation2 + $0xc0] sm:$0xff]
      %v352 = vld [vmem:[#allocation2 + $0xc8] sm:$0xff]
      %v353 = vld [vmem:[#allocation2 + $0xd0] sm:$0xff]
      %v354 = vld [vmem:[#allocation2 + $0xd8] sm:$0xff]
      %v355 = vld [vmem:[#allocation2 + $0xe0] sm:$0xff]
      %v356 = vld [vmem:[#allocation2 + $0xe8] sm:$0xff]
      %v357 = vld [vmem:[#allocation2 + $0xf0] sm:$0xff]
      %v358 = vld [vmem:[#allocation2 + $0xf8] sm:$0xff]
      %v359 = vld [vmem:[%s245] sm:$0xf]
      %v360 = vld [vmem:[%s245 + $0x4] sm:$0xf]
      %v361 = vld [vmem:[%s245 + $0x8] sm:$0xf]
      %v362 = vld [vmem:[%s245 + $0xc] sm:$0xf]
      %v363 = vld [vmem:[%s245 + $0x10] sm:$0xf]
      %v364 = vld [vmem:[%s245 + $0x14] sm:$0xf]
      %v365 = vld [vmem:[%s245 + $0x18] sm:$0xf]
      %v366 = vld [vmem:[%s245 + $0x1c] sm:$0xf]
      %v367 = vld [vmem:[%s245 + $0x20] sm:$0xf]
      %v368 = vld [vmem:[%s245 + $0x24] sm:$0xf]
      %v369 = vld [vmem:[%s245 + $0x28] sm:$0xf]
      %v370 = vld [vmem:[%s245 + $0x2c] sm:$0xf]
      %v371 = vld [vmem:[%s245 + $0x30] sm:$0xf]
      %v372 = vld [vmem:[%s245 + $0x34] sm:$0xf]
      %v373 = vld [vmem:[%s245 + $0x38] sm:$0xf]
      %v374 = vld [vmem:[%s245 + $0x3c] sm:$0xf]
      %v407 = vunpack.c.l.b16 %v295
      %v408 = vunpack.c.l.b16 %v296
      %v409 = vunpack.c.l.b16 %v297
      %v410 = vunpack.c.l.b16 %v298
      %v411 = vunpack.c.l.b16 %v299
      %v412 = vunpack.c.l.b16 %v300
      %v413 = vunpack.c.l.b16 %v301
      %v414 = vunpack.c.l.b16 %v302
      %v415 = vunpack.c.l.b16 %v303
      %v416 = vunpack.c.l.b16 %v304
      %v417 = vunpack.c.l.b16 %v305
      %v418 = vunpack.c.l.b16 %v306
      %v419 = vunpack.c.l.b16 %v307
      %v420 = vunpack.c.l.b16 %v308
      %v421 = vunpack.c.l.b16 %v309
      %v422 = vunpack.c.l.b16 %v310
      %v423 = vunpack.c.l.b16 %v311
      %v424 = vunpack.c.l.b16 %v312
      %v425 = vunpack.c.l.b16 %v313
      %v426 = vunpack.c.l.b16 %v314
      %v427 = vunpack.c.l.b16 %v315
      %v428 = vunpack.c.l.b16 %v316
      %v429 = vunpack.c.l.b16 %v317
      %v430 = vunpack.c.l.b16 %v318
      %v431 = vunpack.c.l.b16 %v319
      %v432 = vunpack.c.l.b16 %v320
      %v433 = vunpack.c.l.b16 %v321
      %v434 = vunpack.c.l.b16 %v322
      %v435 = vunpack.c.l.b16 %v323
      %v436 = vunpack.c.l.b16 %v324
      %v437 = vunpack.c.l.b16 %v325
      %v438 = vunpack.c.l.b16 %v326
      %v439 = vpack.c.b16 %v408, %v407
      %v440 = vpack.c.b16 %v410, %v409
      %v441 = vpack.c.b16 %v412, %v411
      %v442 = vpack.c.b16 %v414, %v413
      %v443 = vpack.c.b16 %v416, %v415
      %v444 = vpack.c.b16 %v418, %v417
      %v445 = vpack.c.b16 %v420, %v419
      %v446 = vpack.c.b16 %v422, %v421
      %v447 = vpack.c.b16 %v424, %v423
      %v448 = vpack.c.b16 %v426, %v425
      %v449 = vpack.c.b16 %v428, %v427
      %v450 = vpack.c.b16 %v430, %v429
      %v451 = vpack.c.b16 %v432, %v431
      %v452 = vpack.c.b16 %v434, %v433
      %v453 = vpack.c.b16 %v436, %v435
      %v454 = vpack.c.b16 %v438, %v437
      %v487 = vunpack.c.l.b16 %v359
      %v488 = vunpack.c.l.b16 %v360
      %v489 = vunpack.c.l.b16 %v361
      %v490 = vunpack.c.l.b16 %v362
      %v491 = vunpack.c.l.b16 %v363
      %v492 = vunpack.c.l.b16 %v364
      %v493 = vunpack.c.l.b16 %v365
      %v494 = vunpack.c.l.b16 %v366
      %v495 = vunpack.c.l.b16 %v367
      %v496 = vunpack.c.l.b16 %v368
      %v497 = vunpack.c.l.b16 %v369
      %v498 = vunpack.c.l.b16 %v370
      %v499 = vunpack.c.l.b16 %v371
      %v500 = vunpack.c.l.b16 %v372
      %v501 = vunpack.c.l.b16 %v373
      %v502 = vunpack.c.l.b16 %v374
      %v503 = vpack.c.b16 %v488, %v487
      %v504 = vpack.c.b16 %v490, %v489
      %v505 = vpack.c.b16 %v492, %v491
      %v506 = vpack.c.b16 %v494, %v493
      %v507 = vpack.c.b16 %v496, %v495
      %v508 = vpack.c.b16 %v498, %v497
      %v509 = vpack.c.b16 %v500, %v499
      %v510 = vpack.c.b16 %v502, %v501
      %519 = vmatpush.bf16.msra.mxu0 %v510
      %520 = vmatpush.bf16.msra.mxu0 %v509
      %521 = vmatpush.bf16.msra.mxu0 %v508
      %522 = vmatpush.bf16.msra.mxu0 %v507
      %523 = vmatpush.bf16.msra.mxu0 %v506
      %524 = vmatpush.bf16.msra.mxu0 %v505
      %525 = vmatpush.bf16.msra.mxu0 %v504
      %526 = vmatpush.bf16.msra.mxu0 %v503
      %527 = vmatmul.bf16.gmra.mxu0 %v439
      %v528 = vpop.f32.mrf.mxu0
      %v529 = vadd.f32 0.0, %v528
      %v530 = vpop.f32.mrf.mxu0
      %v531 = vadd.f32 0.0, %v530
      %532 = vmatmul.bf16.gmra.mxu0 %v440
      %v533 = vpop.f32.mrf.mxu0
      %v534 = vadd.f32 0.0, %v533
      %v535 = vpop.f32.mrf.mxu0
      %v536 = vadd.f32 0.0, %v535
      %537 = vmatmul.bf16.gmra.mxu0 %v441
      %v538 = vpop.f32.mrf.mxu0
      %v539 = vadd.f32 0.0, %v538
      %v540 = vpop.f32.mrf.mxu0
      %v541 = vadd.f32 0.0, %v540
      %542 = vmatmul.bf16.gmra.mxu0 %v442
      %v543 = vpop.f32.mrf.mxu0
      %v544 = vadd.f32 0.0, %v543
      %v545 = vpop.f32.mrf.mxu0
      %v546 = vadd.f32 0.0, %v545
      %547 = vmatmul.bf16.gmra.mxu0 %v443
      %v548 = vpop.f32.mrf.mxu0
      %v549 = vadd.f32 0.0, %v548
      %v550 = vpop.f32.mrf.mxu0
      %v551 = vadd.f32 0.0, %v550
      %552 = vmatmul.bf16.gmra.mxu0 %v444
      %v553 = vpop.f32.mrf.mxu0
      %v554 = vadd.f32 0.0, %v553
      %v555 = vpop.f32.mrf.mxu0
      %v556 = vadd.f32 0.0, %v555
      %557 = vmatmul.bf16.gmra.mxu0 %v445
      %v558 = vpop.f32.mrf.mxu0
      %v559 = vadd.f32 0.0, %v558
      %v560 = vpop.f32.mrf.mxu0
      %v561 = vadd.f32 0.0, %v560
      %562 = vmatmul.bf16.gmra.mxu0 %v446
      %v563 = vpop.f32.mrf.mxu0
      %v564 = vadd.f32 0.0, %v563
      %v565 = vpop.f32.mrf.mxu0
      %v566 = vadd.f32 0.0, %v565
      %567 = vmatmul.bf16.gmra.mxu0 %v447
      %v568 = vpop.f32.mrf.mxu0
      %v569 = vadd.f32 0.0, %v568
      %v570 = vpop.f32.mrf.mxu0
      %v571 = vadd.f32 0.0, %v570
      %572 = vmatmul.bf16.gmra.mxu0 %v448
      %v573 = vpop.f32.mrf.mxu0
      %v574 = vadd.f32 0.0, %v573
      %v575 = vpop.f32.mrf.mxu0
      %v576 = vadd.f32 0.0, %v575
      %577 = vmatmul.bf16.gmra.mxu0 %v449
      %v578 = vpop.f32.mrf.mxu0
      %v579 = vadd.f32 0.0, %v578
      %v580 = vpop.f32.mrf.mxu0
      %v581 = vadd.f32 0.0, %v580
      %582 = vmatmul.bf16.gmra.mxu0 %v450
      %v583 = vpop.f32.mrf.mxu0
      %v584 = vadd.f32 0.0, %v583
      %v585 = vpop.f32.mrf.mxu0
      %v586 = vadd.f32 0.0, %v585
      %587 = vmatmul.bf16.gmra.mxu0 %v451
      %v588 = vpop.f32.mrf.mxu0
      %v589 = vadd.f32 0.0, %v588
      %v590 = vpop.f32.mrf.mxu0
      %v591 = vadd.f32 0.0, %v590
      %592 = vmatmul.bf16.gmra.mxu0 %v452
      %v593 = vpop.f32.mrf.mxu0
      %v594 = vadd.f32 0.0, %v593
      %v595 = vpop.f32.mrf.mxu0
      %v596 = vadd.f32 0.0, %v595
      %597 = vmatmul.bf16.gmra.mxu0 %v453
      %v598 = vpop.f32.mrf.mxu0
      %v599 = vadd.f32 0.0, %v598
      %v600 = vpop.f32.mrf.mxu0
      %v601 = vadd.f32 0.0, %v600
      %602 = vmatmul.bf16.gmra.mxu0 %v454
      %v603 = vpop.f32.mrf.mxu0
      %v604 = vadd.f32 0.0, %v603
      %v605 = vpop.f32.mrf.mxu0
      %v606 = vadd.f32 0.0, %v605
      %607 = vdwg.mxu0
      %v608 = vadd.f32 %v327, %v529
      %v609 = vadd.f32 %v328, %v531
      %v610 = vadd.f32 %v329, %v534
      %v611 = vadd.f32 %v330, %v536
      %v612 = vadd.f32 %v331, %v539
      %v613 = vadd.f32 %v332, %v541
      %v614 = vadd.f32 %v333, %v544
      %v615 = vadd.f32 %v334, %v546
      %v616 = vadd.f32 %v335, %v549
      %v617 = vadd.f32 %v336, %v551
      %v618 = vadd.f32 %v337, %v554
      %v619 = vadd.f32 %v338, %v556
      %v620 = vadd.f32 %v339, %v559
      %v621 = vadd.f32 %v340, %v561
      %v622 = vadd.f32 %v341, %v564
      %v623 = vadd.f32 %v342, %v566
      %v624 = vadd.f32 %v343, %v569
      %v625 = vadd.f32 %v344, %v571
      %v626 = vadd.f32 %v345, %v574
      %v627 = vadd.f32 %v346, %v576
      %v628 = vadd.f32 %v347, %v579
      %v629 = vadd.f32 %v348, %v581
      %v630 = vadd.f32 %v349, %v584
      %v631 = vadd.f32 %v350, %v586
      %v632 = vadd.f32 %v351, %v589
      %v633 = vadd.f32 %v352, %v591
      %v634 = vadd.f32 %v353, %v594
      %v635 = vadd.f32 %v354, %v596
      %v636 = vadd.f32 %v355, %v599
      %v637 = vadd.f32 %v356, %v601
      %v638 = vadd.f32 %v357, %v604
      %v639 = vadd.f32 %v358, %v606
      %640 = vst [vmem:[#allocation2] sm:$0xff] %v608
      %641 = vst [vmem:[#allocation2 + $0x8] sm:$0xff] %v609
      %642 = vst [vmem:[#allocation2 + $0x10] sm:$0xff] %v610
      %643 = vst [vmem:[#allocation2 + $0x18] sm:$0xff] %v611
      %644 = vst [vmem:[#allocation2 + $0x20] sm:$0xff] %v612
      %645 = vst [vmem:[#allocation2 + $0x28] sm:$0xff] %v613
      %646 = vst [vmem:[#allocation2 + $0x30] sm:$0xff] %v614
      %647 = vst [vmem:[#allocation2 + $0x38] sm:$0xff] %v615
      %648 = vst [vmem:[#allocation2 + $0x40] sm:$0xff] %v616
      %649 = vst [vmem:[#allocation2 + $0x48] sm:$0xff] %v617
      %650 = vst [vmem:[#allocation2 + $0x50] sm:$0xff] %v618
      %651 = vst [vmem:[#allocation2 + $0x58] sm:$0xff] %v619
      %652 = vst [vmem:[#allocation2 + $0x60] sm:$0xff] %v620
      %653 = vst [vmem:[#allocation2 + $0x68] sm:$0xff] %v621
      %654 = vst [vmem:[#allocation2 + $0x70] sm:$0xff] %v622
      %655 = vst [vmem:[#allocation2 + $0x78] sm:$0xff] %v623
      %656 = vst [vmem:[#allocation2 + $0x80] sm:$0xff] %v624
      %657 = vst [vmem:[#allocation2 + $0x88] sm:$0xff] %v625
      %658 = vst [vmem:[#allocation2 + $0x90] sm:$0xff] %v626
      %659 = vst [vmem:[#allocation2 + $0x98] sm:$0xff] %v627
      %660 = vst [vmem:[#allocation2 + $0xa0] sm:$0xff] %v628
      %661 = vst [vmem:[#allocation2 + $0xa8] sm:$0xff] %v629
      %662 = vst [vmem:[#allocation2 + $0xb0] sm:$0xff] %v630
      %663 = vst [vmem:[#allocation2 + $0xb8] sm:$0xff] %v631
      %664 = vst [vmem:[#allocation2 + $0xc0] sm:$0xff] %v632
      %665 = vst [vmem:[#allocation2 + $0xc8] sm:$0xff] %v633
      %666 = vst [vmem:[#allocation2 + $0xd0] sm:$0xff] %v634
      %667 = vst [vmem:[#allocation2 + $0xd8] sm:$0xff] %v635
      %668 = vst [vmem:[#allocation2 + $0xe0] sm:$0xff] %v636
      %669 = vst [vmem:[#allocation2 + $0xe8] sm:$0xff] %v637
      %670 = vst [vmem:[#allocation2 + $0xf0] sm:$0xff] %v638
      %671 = vst [vmem:[#allocation2 + $0xf8] sm:$0xff] %v639
      // Predicated region
      $region37: #{upblock_forward.4} parent=31 // pred_check
        %p672 = pneg %p259
      $region38: #{upblock_forward.4} parent=31 // pred_check_branch
        %674 = sbr.rel (%p672) target = $region40
      $region39: #{upblock_forward.4} parent=31 // pred_region
        %v675 = vld [vmem:[#allocation2] sm:$0xff]
        %v676 = vld [vmem:[#allocation2 + $0x8] sm:$0xff]
        %v677 = vld [vmem:[#allocation2 + $0x10] sm:$0xff]
        %v678 = vld [vmem:[#allocation2 + $0x18] sm:$0xff]
        %v679 = vld [vmem:[#allocation2 + $0x20] sm:$0xff]
        %v680 = vld [vmem:[#allocation2 + $0x28] sm:$0xff]
        %v681 = vld [vmem:[#allocation2 + $0x30] sm:$0xff]
        %v682 = vld [vmem:[#allocation2 + $0x38] sm:$0xff]
        %v683 = vld [vmem:[#allocation2 + $0x40] sm:$0xff]
        %v684 = vld [vmem:[#allocation2 + $0x48] sm:$0xff]
        %v685 = vld [vmem:[#allocation2 + $0x50] sm:$0xff]
        %v686 = vld [vmem:[#allocation2 + $0x58] sm:$0xff]
        %v687 = vld [vmem:[#allocation2 + $0x60] sm:$0xff]
        %v688 = vld [vmem:[#allocation2 + $0x68] sm:$0xff]
        %v689 = vld [vmem:[#allocation2 + $0x70] sm:$0xff]
        %v690 = vld [vmem:[#allocation2 + $0x78] sm:$0xff]
        %v691 = vld [vmem:[#allocation2 + $0x80] sm:$0xff]
        %v692 = vld [vmem:[#allocation2 + $0x88] sm:$0xff]
        %v693 = vld [vmem:[#allocation2 + $0x90] sm:$0xff]
        %v694 = vld [vmem:[#allocation2 + $0x98] sm:$0xff]
        %v695 = vld [vmem:[#allocation2 + $0xa0] sm:$0xff]
        %v696 = vld [vmem:[#allocation2 + $0xa8] sm:$0xff]
        %v697 = vld [vmem:[#allocation2 + $0xb0] sm:$0xff]
        %v698 = vld [vmem:[#allocation2 + $0xb8] sm:$0xff]
        %v699 = vld [vmem:[#allocation2 + $0xc0] sm:$0xff]
        %v700 = vld [vmem:[#allocation2 + $0xc8] sm:$0xff]
        %v701 = vld [vmem:[#allocation2 + $0xd0] sm:$0xff]
        %v702 = vld [vmem:[#allocation2 + $0xd8] sm:$0xff]
        %v703 = vld [vmem:[#allocation2 + $0xe0] sm:$0xff]
        %v704 = vld [vmem:[#allocation2 + $0xe8] sm:$0xff]
        %v705 = vld [vmem:[#allocation2 + $0xf0] sm:$0xff]
        %v706 = vld [vmem:[#allocation2 + $0xf8] sm:$0xff]
        %v707 = vld [vmem:[%s249] sm:$0x1]
        %v709 = vperm.slane %v707, 0
        %v711 = vadd.f32 %v675, %v709
        %v712 = vadd.f32 %v676, %v709
        %v713 = vadd.f32 %v677, %v709
        %v714 = vadd.f32 %v678, %v709
        %v715 = vadd.f32 %v679, %v709
        %v716 = vadd.f32 %v680, %v709
        %v717 = vadd.f32 %v681, %v709
        %v718 = vadd.f32 %v682, %v709
        %v719 = vadd.f32 %v683, %v709
        %v720 = vadd.f32 %v684, %v709
        %v721 = vadd.f32 %v685, %v709
        %v722 = vadd.f32 %v686, %v709
        %v723 = vadd.f32 %v687, %v709
        %v724 = vadd.f32 %v688, %v709
        %v725 = vadd.f32 %v689, %v709
        %v726 = vadd.f32 %v690, %v709
        %v727 = vadd.f32 %v691, %v709
        %v728 = vadd.f32 %v692, %v709
        %v729 = vadd.f32 %v693, %v709
        %v730 = vadd.f32 %v694, %v709
        %v731 = vadd.f32 %v695, %v709
        %v732 = vadd.f32 %v696, %v709
        %v733 = vadd.f32 %v697, %v709
        %v734 = vadd.f32 %v698, %v709
        %v735 = vadd.f32 %v699, %v709
        %v736 = vadd.f32 %v700, %v709
        %v737 = vadd.f32 %v701, %v709
        %v738 = vadd.f32 %v702, %v709
        %v739 = vadd.f32 %v703, %v709
        %v740 = vadd.f32 %v704, %v709
        %v741 = vadd.f32 %v705, %v709
        %v742 = vadd.f32 %v706, %v709
        %v743 = vpack.c.bf16 %v711, %v711
        %v744 = vpack.c.bf16 %v712, %v712
        %v745 = vpack.c.bf16 %v713, %v713
        %v746 = vpack.c.bf16 %v714, %v714
        %v747 = vpack.c.bf16 %v715, %v715
        %v748 = vpack.c.bf16 %v716, %v716
        %v749 = vpack.c.bf16 %v717, %v717
        %v750 = vpack.c.bf16 %v718, %v718
        %v751 = vpack.c.bf16 %v719, %v719
        %v752 = vpack.c.bf16 %v720, %v720
        %v753 = vpack.c.bf16 %v721, %v721
        %v754 = vpack.c.bf16 %v722, %v722
        %v755 = vpack.c.bf16 %v723, %v723
        %v756 = vpack.c.bf16 %v724, %v724
        %v757 = vpack.c.bf16 %v725, %v725
        %v758 = vpack.c.bf16 %v726, %v726
        %v759 = vpack.c.bf16 %v727, %v727
        %v760 = vpack.c.bf16 %v728, %v728
        %v761 = vpack.c.bf16 %v729, %v729
        %v762 = vpack.c.bf16 %v730, %v730
        %v763 = vpack.c.bf16 %v731, %v731
        %v764 = vpack.c.bf16 %v732, %v732
        %v765 = vpack.c.bf16 %v733, %v733
        %v766 = vpack.c.bf16 %v734, %v734
        %v767 = vpack.c.bf16 %v735, %v735
        %v768 = vpack.c.bf16 %v736, %v736
        %v769 = vpack.c.bf16 %v737, %v737
        %v770 = vpack.c.bf16 %v738, %v738
        %v771 = vpack.c.bf16 %v739, %v739
        %v772 = vpack.c.bf16 %v740, %v740
        %v773 = vpack.c.bf16 %v741, %v741
        %v774 = vpack.c.bf16 %v742, %v742
        %775 = vst [vmem:[%s257] sm:$0xf] %v743
        %776 = vst [vmem:[%s257 + $0x4] sm:$0xf] %v744
        %777 = vst [vmem:[%s257 + $0x8] sm:$0xf] %v745
        %778 = vst [vmem:[%s257 + $0xc] sm:$0xf] %v746
        %779 = vst [vmem:[%s257 + $0x10] sm:$0xf] %v747
        %780 = vst [vmem:[%s257 + $0x14] sm:$0xf] %v748
        %781 = vst [vmem:[%s257 + $0x18] sm:$0xf] %v749
        %782 = vst [vmem:[%s257 + $0x1c] sm:$0xf] %v750
        %783 = vst [vmem:[%s257 + $0x20] sm:$0xf] %v751
        %784 = vst [vmem:[%s257 + $0x24] sm:$0xf] %v752
        %785 = vst [vmem:[%s257 + $0x28] sm:$0xf] %v753
        %786 = vst [vmem:[%s257 + $0x2c] sm:$0xf] %v754
        %787 = vst [vmem:[%s257 + $0x30] sm:$0xf] %v755
        %788 = vst [vmem:[%s257 + $0x34] sm:$0xf] %v756
        %789 = vst [vmem:[%s257 + $0x38] sm:$0xf] %v757
        %790 = vst [vmem:[%s257 + $0x3c] sm:$0xf] %v758
        %791 = vst [vmem:[%s257 + $0x40] sm:$0xf] %v759
        %792 = vst [vmem:[%s257 + $0x44] sm:$0xf] %v760
        %793 = vst [vmem:[%s257 + $0x48] sm:$0xf] %v761
        %794 = vst [vmem:[%s257 + $0x4c] sm:$0xf] %v762
        %795 = vst [vmem:[%s257 + $0x50] sm:$0xf] %v763
        %796 = vst [vmem:[%s257 + $0x54] sm:$0xf] %v764
        %797 = vst [vmem:[%s257 + $0x58] sm:$0xf] %v765
        %798 = vst [vmem:[%s257 + $0x5c] sm:$0xf] %v766
        %799 = vst [vmem:[%s257 + $0x60] sm:$0xf] %v767
        %800 = vst [vmem:[%s257 + $0x64] sm:$0xf] %v768
        %801 = vst [vmem:[%s257 + $0x68] sm:$0xf] %v769
        %802 = vst [vmem:[%s257 + $0x6c] sm:$0xf] %v770
        %803 = vst [vmem:[%s257 + $0x70] sm:$0xf] %v771
        %804 = vst [vmem:[%s257 + $0x74] sm:$0xf] %v772
        %805 = vst [vmem:[%s257 + $0x78] sm:$0xf] %v773
        %806 = vst [vmem:[%s257 + $0x7c] sm:$0xf] %v774
      $region40: #{upblock_forward.4} parent=31 // pred_fallthru
        _
      %s807 = smul.u32 32, %s19
      %p808 = scmp.lt.s32.totalorder %s807, 63
      %s809 = scalar_select %p808, %s807, 63
      %p810 = scmp.lt.s32.totalorder %s20, 0
      %s811 = scalar_select %p810, %s20, 0
      %s812 = sadd.s32 %s811, %s809
      %s813 = smul.addr %s812, 4
      %s814 = scalar_lea.vmem %s3, %s813
      // Predicated region
      $region41: #{upblock_forward.4} parent=31 // pred_check
        %p815 = pneg %p135
      $region42: #{upblock_forward.4} parent=31 // pred_check_branch
        %817 = sbr.rel (%p815) target = $region44
      $region43: #{upblock_forward.4} parent=31 // pred_region
        %s818 = smul.u32 32, %s19
      $region44: #{upblock_forward.4} parent=31 // pred_fallthru
        _
    $region32: #{upblock_forward.4} parent=5 // pred_fallthru
      _
    %p819 = scmp.le.s32.totalorder 2, %s9
    // Predicated region
    $region45: #{upblock_forward.4} parent=5 // pred_check
      %p820 = pneg %p819
    $region46: #{upblock_forward.4} parent=5 // pred_check_branch
      %822 = sbr.rel (%p820) target = $region48
    $region47: #{upblock_forward.4} parent=5 // pred_region
      %s823 = ssub.s32 %s9, 2
      // Predicated region
      $region49: #{upblock_forward.4} parent=47 // pred_check
        %p824 = pneg %p141
      $region50: #{upblock_forward.4} parent=47 // pred_check_branch
        %826 = sbr.rel (%p824) target = $region52
      $region51: #{upblock_forward.4} parent=47 // pred_region
        %s827 = smul.u32 32, %s22
        %p828 = scmp.lt.s32.totalorder %s827, 63
        %s829 = scalar_select %p828, %s827, 63
        %p830 = scmp.lt.s32.totalorder %s23, 0
        %s831 = scalar_select %p830, %s23, 0
        %s832 = sadd.s32 %s831, %s829
        %s833 = smul.addr %s832, 4
        %s834 = scalar_lea.vmem %s3, %s833
      $region52: #{upblock_forward.4} parent=47 // pred_fallthru
        _
    $region48: #{upblock_forward.4} parent=5 // pred_fallthru
      _
  $region6: #{upblock_forward.4} parent=0 // loop_footer
    %s13 = sadd.s32 1, %s9
  $region7: #{upblock_forward.4} parent=0 // loop_footer_branch
    %8 = sbr.rel target = $region3
  $region8: #{upblock_forward.4} parent=0 // loop_exit
    _

// kernel: upblock_forward.6
$region0: #{upblock_forward.6}
  #allocation0 [shape = 'u32[]', space=smem, size = 0x4, offset = 0x4, fixed_abs, tag = 'smem constant byte address 0x4 - core index']
  #allocation1 [shape = 'u32[72,128]{1,0:T(1,128)}', space=vmem, size = 0x9000, scoped, tag = 'internal scratch']
  %s0 = inlined_call_operand.vmem [shape: bf16[512,128], index: 0, kind: input, shape index: {}]
  %s1 = inlined_call_operand.vmem [shape: f32[1,128], index: 1, kind: output, shape index: {0}]
  %s2 = inlined_call_operand.vmem [shape: f32[1,128], index: 2, kind: output, shape index: {1}]
  %3 = xla_tuple %s1, %s2
  %s4 = sld [smem:[#allocation0]]
  $region26: #{upblock_forward.6} parent=0
    _
  %s6 = ssub.s32 1, %s4
  %s7 = scalar_select 0, %s6, %s4
  // Predicated region
  $region2: #{upblock_forward.6} parent=0 // pred_check
    _
  $region3: #{upblock_forward.6} parent=0 // pred_check_branch
    %9 = sbr.rel (0) target = $region5
  $region4: #{upblock_forward.6} parent=0 // pred_region
    _
  $region5: #{upblock_forward.6} parent=0 // pred_fallthru
    _
  %p10 = scmp.eq.s32.totalorder 0, 0
  // Predicated region
  $region6: #{upblock_forward.6} parent=0 // pred_check
    %p11 = pneg %p10
  $region7: #{upblock_forward.6} parent=0 // pred_check_branch
    %13 = sbr.rel (%p11) target = $region9
  $region8: #{upblock_forward.6} parent=0 // pred_region
    %14 = vst [vmem:[%s1] sm:$0x1] 0.0
    %15 = vst [vmem:[%s2] sm:$0x1] 0.0
  $region9: #{upblock_forward.6} parent=0 // pred_fallthru
    _
  %v16 = vld [vmem:[%s0] sm:$0xf]
  %v17 = vld [vmem:[%s0 + $0x4] sm:$0xf]
  %v18 = vld [vmem:[%s0 + $0x8] sm:$0xf]
  %v19 = vld [vmem:[%s0 + $0xc] sm:$0xf]
  %v20 = vld [vmem:[%s0 + $0x10] sm:$0xf]
  %v21 = vld [vmem:[%s0 + $0x14] sm:$0xf]
  %v22 = vld [vmem:[%s0 + $0x18] sm:$0xf]
  %v23 = vld [vmem:[%s0 + $0x1c] sm:$0xf]
  %v24 = vld [vmem:[%s0 + $0x20] sm:$0xf]
  %v25 = vld [vmem:[%s0 + $0x24] sm:$0xf]
  %v26 = vld [vmem:[%s0 + $0x28] sm:$0xf]
  %v27 = vld [vmem:[%s0 + $0x2c] sm:$0xf]
  %v28 = vld [vmem:[%s0 + $0x30] sm:$0xf]
  %v29 = vld [vmem:[%s0 + $0x34] sm:$0xf]
  %v30 = vld [vmem:[%s0 + $0x38] sm:$0xf]
  %v31 = vld [vmem:[%s0 + $0x3c] sm:$0xf]
  %v32 = vld [vmem:[%s0 + $0x40] sm:$0xf]
  %v33 = vld [vmem:[%s0 + $0x44] sm:$0xf]
  %v34 = vld [vmem:[%s0 + $0x48] sm:$0xf]
  %v35 = vld [vmem:[%s0 + $0x4c] sm:$0xf]
  %v36 = vld [vmem:[%s0 + $0x50] sm:$0xf]
  %v37 = vld [vmem:[%s0 + $0x54] sm:$0xf]
  %v38 = vld [vmem:[%s0 + $0x58] sm:$0xf]
  %v39 = vld [vmem:[%s0 + $0x5c] sm:$0xf]
  %v40 = vld [vmem:[%s0 + $0x60] sm:$0xf]
  %v41 = vld [vmem:[%s0 + $0x64] sm:$0xf]
  %v42 = vld [vmem:[%s0 + $0x68] sm:$0xf]
  %v43 = vld [vmem:[%s0 + $0x6c] sm:$0xf]
  %v44 = vld [vmem:[%s0 + $0x70] sm:$0xf]
  %v45 = vld [vmem:[%s0 + $0x74] sm:$0xf]
  %v46 = vld [vmem:[%s0 + $0x78] sm:$0xf]
  %v47 = vld [vmem:[%s0 + $0x7c] sm:$0xf]
  %v48 = vld [vmem:[%s0 + $0x80] sm:$0xf]
  %v49 = vld [vmem:[%s0 + $0x84] sm:$0xf]
  %v50 = vld [vmem:[%s0 + $0x88] sm:$0xf]
  %v51 = vld [vmem:[%s0 + $0x8c] sm:$0xf]
  %v52 = vld [vmem:[%s0 + $0x90] sm:$0xf]
  %v53 = vld [vmem:[%s0 + $0x94] sm:$0xf]
  %v54 = vld [vmem:[%s0 + $0x98] sm:$0xf]
  %v55 = vld [vmem:[%s0 + $0x9c] sm:$0xf]
  %v56 = vld [vmem:[%s0 + $0xa0] sm:$0xf]
  %v57 = vld [vmem:[%s0 + $0xa4] sm:$0xf]
  %v58 = vld [vmem:[%s0 + $0xa8] sm:$0xf]
  %v59 = vld [vmem:[%s0 + $0xac] sm:$0xf]
  %v60 = vld [vmem:[%s0 + $0xb0] sm:$0xf]
  %v61 = vld [vmem:[%s0 + $0xb4] sm:$0xf]
  %v62 = vld [vmem:[%s0 + $0xb8] sm:$0xf]
  %v63 = vld [vmem:[%s0 + $0xbc] sm:$0xf]
  %v64 = vld [vmem:[%s0 + $0xc0] sm:$0xf]
  %v65 = vld [vmem:[%s0 + $0xc4] sm:$0xf]
  %v66 = vld [vmem:[%s0 + $0xc8] sm:$0xf]
  %v67 = vld [vmem:[%s0 + $0xcc] sm:$0xf]
  %v68 = vld [vmem:[%s0 + $0xd0] sm:$0xf]
  %v69 = vld [vmem:[%s0 + $0xd4] sm:$0xf]
  %v70 = vld [vmem:[%s0 + $0xd8] sm:$0xf]
  %v71 = vld [vmem:[%s0 + $0xdc] sm:$0xf]
  %v72 = vld [vmem:[%s0 + $0xe0] sm:$0xf]
  %v73 = vld [vmem:[%s0 + $0xe4] sm:$0xf]
  %v74 = vld [vmem:[%s0 + $0xe8] sm:$0xf]
  %v75 = vld [vmem:[%s0 + $0xec] sm:$0xf]
  %v76 = vld [vmem:[%s0 + $0xf0] sm:$0xf]
  %v77 = vld [vmem:[%s0 + $0xf4] sm:$0xf]
  %v78 = vld [vmem:[%s0 + $0xf8] sm:$0xf]
  %v79 = vld [vmem:[%s0 + $0xfc] sm:$0xf]
  %v80 = vunpack.c.l.bf16 %v16
  %v81 = vunpack.c.l.bf16 %v17
  %v82 = vunpack.c.l.bf16 %v18
  %v83 = vunpack.c.l.bf16 %v19
  %v84 = vunpack.c.l.bf16 %v20
  %v85 = vunpack.c.l.bf16 %v21
  %v86 = vunpack.c.l.bf16 %v22
  %v87 = vunpack.c.l.bf16 %v23
  %v88 = vunpack.c.l.bf16 %v24
  %v89 = vunpack.c.l.bf16 %v25
  %v90 = vunpack.c.l.bf16 %v26
  %v91 = vunpack.c.l.bf16 %v27
  %v92 = vunpack.c.l.bf16 %v28
  %v93 = vunpack.c.l.bf16 %v29
  %v94 = vunpack.c.l.bf16 %v30
  %v95 = vunpack.c.l.bf16 %v31
  %v96 = vunpack.c.l.bf16 %v32
  %v97 = vunpack.c.l.bf16 %v33
  %v98 = vunpack.c.l.bf16 %v34
  %v99 = vunpack.c.l.bf16 %v35
  %v100 = vunpack.c.l.bf16 %v36
  %v101 = vunpack.c.l.bf16 %v37
  %v102 = vunpack.c.l.bf16 %v38
  %v103 = vunpack.c.l.bf16 %v39
  %v104 = vunpack.c.l.bf16 %v40
  %v105 = vunpack.c.l.bf16 %v41
  %v106 = vunpack.c.l.bf16 %v42
  %v107 = vunpack.c.l.bf16 %v43
  %v108 = vunpack.c.l.bf16 %v44
  %v109 = vunpack.c.l.bf16 %v45
  %v110 = vunpack.c.l.bf16 %v46
  %v111 = vunpack.c.l.bf16 %v47
  %v112 = vunpack.c.l.bf16 %v48
  %v113 = vunpack.c.l.bf16 %v49
  %v114 = vunpack.c.l.bf16 %v50
  %v115 = vunpack.c.l.bf16 %v51
  %v116 = vunpack.c.l.bf16 %v52
  %v117 = vunpack.c.l.bf16 %v53
  %v118 = vunpack.c.l.bf16 %v54
  %v119 = vunpack.c.l.bf16 %v55
  %v120 = vunpack.c.l.bf16 %v56
  %v121 = vunpack.c.l.bf16 %v57
  %v122 = vunpack.c.l.bf16 %v58
  %v123 = vunpack.c.l.bf16 %v59
  %v124 = vunpack.c.l.bf16 %v60
  %v125 = vunpack.c.l.bf16 %v61
  %v126 = vunpack.c.l.bf16 %v62
  %v127 = vunpack.c.l.bf16 %v63
  %v128 = vunpack.c.l.bf16 %v64
  %v129 = vunpack.c.l.bf16 %v65
  %v130 = vunpack.c.l.bf16 %v66
  %v131 = vunpack.c.l.bf16 %v67
  %v132 = vunpack.c.l.bf16 %v68
  %v133 = vunpack.c.l.bf16 %v69
  %v134 = vunpack.c.l.bf16 %v70
  %v135 = vunpack.c.l.bf16 %v71
  %v136 = vunpack.c.l.bf16 %v72
  %v137 = vunpack.c.l.bf16 %v73
  %v138 = vunpack.c.l.bf16 %v74
  %v139 = vunpack.c.l.bf16 %v75
  %v140 = vunpack.c.l.bf16 %v76
  %v141 = vunpack.c.l.bf16 %v77
  %v142 = vunpack.c.l.bf16 %v78
  %v143 = vunpack.c.l.bf16 %v79
  %s144 = smul.u32 0, 512
  %v145 = vlaneseq
  %v146 = vshrl.u32 %v145, 7
  %v147 = vadd.s32 %v146, 8
  %v148 = vadd.s32 %v146, 16
  %v149 = vadd.s32 %v146, 24
  %v150 = vadd.s32 %v146, 32
  %v151 = vadd.s32 %v146, 40
  %v152 = vadd.s32 %v146, 48
  %v153 = vadd.s32 %v146, 56
  %v154 = vadd.s32 %v146, 64
  %v155 = vadd.s32 %v146, 72
  %v156 = vadd.s32 %v146, 80
  %v157 = vadd.s32 %v146, 88
  %v158 = vadd.s32 %v146, 96
  %v159 = vadd.s32 %v146, 104
  %v160 = vadd.s32 %v146, 112
  %v161 = vadd.s32 %v146, 120
  %v162 = vadd.s32 %v146, 128
  %v163 = vadd.s32 %v146, 136
  %v164 = vadd.s32 %v146, 144
  %v165 = vadd.s32 %v146, 152
  %v166 = vadd.s32 %v146, 160
  %v167 = vadd.s32 %v146, 168
  %v168 = vadd.s32 %v146, 176
  %v169 = vadd.s32 %v146, 184
  %v170 = vadd.s32 %v146, 192
  %v171 = vadd.s32 %v146, 200
  %v172 = vadd.s32 %v146, 208
  %v173 = vadd.s32 %v146, 216
  %v174 = vadd.s32 %v146, 224
  %v175 = vadd.s32 %v146, 232
  %v176 = vadd.s32 %v146, 240
  %v177 = vadd.s32 %v146, 248
  %v178 = vadd.s32 %v146, 256
  %v179 = vadd.s32 %v146, 264
  %v180 = vadd.s32 %v146, 272
  %v181 = vadd.s32 %v146, 280
  %v182 = vadd.s32 %v146, 288
  %v183 = vadd.s32 %v146, 296
  %v184 = vadd.s32 %v146, 304
  %v185 = vadd.s32 %v146, 312
  %v186 = vadd.s32 %v146, 320
  %v187 = vadd.s32 %v146, 328
  %v188 = vadd.s32 %v146, 336
  %v189 = vadd.s32 %v146, 344
  %v190 = vadd.s32 %v146, 352
  %v191 = vadd.s32 %v146, 360
  %v192 = vadd.s32 %v146, 368
  %v193 = vadd.s32 %v146, 376
  %v194 = vadd.s32 %v146, 384
  %v195 = vadd.s32 %v146, 392
  %v196 = vadd.s32 %v146, 400
  %v197 = vadd.s32 %v146, 408
  %v198 = vadd.s32 %v146, 416
  %v199 = vadd.s32 %v146, 424
  %v200 = vadd.s32 %v146, 432
  %v201 = vadd.s32 %v146, 440
  %v202 = vadd.s32 %v146, 448
  %v203 = vadd.s32 %v146, 456
  %v204 = vadd.s32 %v146, 464
  %v205 = vadd.s32 %v146, 472
  %v206 = vadd.s32 %v146, 480
  %v207 = vadd.s32 %v146, 488
  %v208 = vadd.s32 %v146, 496
  %v209 = vadd.s32 %v146, 504
  %v210 = vstv %s144
  %v211 = vadd.s32 %v210, %v146
  %v212 = vadd.s32 %v210, %v147
  %v213 = vadd.s32 %v210, %v148
  %v214 = vadd.s32 %v210, %v149
  %v215 = vadd.s32 %v210, %v150
  %v216 = vadd.s32 %v210, %v151
  %v217 = vadd.s32 %v210, %v152
  %v218 = vadd.s32 %v210, %v153
  %v219 = vadd.s32 %v210, %v154
  %v220 = vadd.s32 %v210, %v155
  %v221 = vadd.s32 %v210, %v156
  %v222 = vadd.s32 %v210, %v157
  %v223 = vadd.s32 %v210, %v158
  %v224 = vadd.s32 %v210, %v159
  %v225 = vadd.s32 %v210, %v160
  %v226 = vadd.s32 %v210, %v161
  %v227 = vadd.s32 %v210, %v162
  %v228 = vadd.s32 %v210, %v163
  %v229 = vadd.s32 %v210, %v164
  %v230 = vadd.s32 %v210, %v165
  %v231 = vadd.s32 %v210, %v166
  %v232 = vadd.s32 %v210, %v167
  %v233 = vadd.s32 %v210, %v168
  %v234 = vadd.s32 %v210, %v169
  %v235 = vadd.s32 %v210, %v170
  %v236 = vadd.s32 %v210, %v171
  %v237 = vadd.s32 %v210, %v172
  %v238 = vadd.s32 %v210, %v173
  %v239 = vadd.s32 %v210, %v174
  %v240 = vadd.s32 %v210, %v175
  %v241 = vadd.s32 %v210, %v176
  %v242 = vadd.s32 %v210, %v177
  %v243 = vadd.s32 %v210, %v178
  %v244 = vadd.s32 %v210, %v179
  %v245 = vadd.s32 %v210, %v180
  %v246 = vadd.s32 %v210, %v181
  %v247 = vadd.s32 %v210, %v182
  %v248 = vadd.s32 %v210, %v183
  %v249 = vadd.s32 %v210, %v184
  %v250 = vadd.s32 %v210, %v185
  %v251 = vadd.s32 %v210, %v186
  %v252 = vadd.s32 %v210, %v187
  %v253 = vadd.s32 %v210, %v188
  %v254 = vadd.s32 %v210, %v189
  %v255 = vadd.s32 %v210, %v190
  %v256 = vadd.s32 %v210, %v191
  %v257 = vadd.s32 %v210, %v192
  %v258 = vadd.s32 %v210, %v193
  %v259 = vadd.s32 %v210, %v194
  %v260 = vadd.s32 %v210, %v195
  %v261 = vadd.s32 %v210, %v196
  %v262 = vadd.s32 %v210, %v197
  %v263 = vadd.s32 %v210, %v198
  %v264 = vadd.s32 %v210, %v199
  %v265 = vadd.s32 %v210, %v200
  %v266 = vadd.s32 %v210, %v201
  %v267 = vadd.s32 %v210, %v202
  %v268 = vadd.s32 %v210, %v203
  %v269 = vadd.s32 %v210, %v204
  %v270 = vadd.s32 %v210, %v205
  %v271 = vadd.s32 %v210, %v206
  %v272 = vadd.s32 %v210, %v207
  %v273 = vadd.s32 %v210, %v208
  %v274 = vadd.s32 %v210, %v209
  %vm275 = vcmp.lt.s32.totalorder %v211, 512
  %vm276 = vcmp.lt.s32.totalorder %v212, 512
  %vm277 = vcmp.lt.s32.totalorder %v213, 512
  %vm278 = vcmp.lt.s32.totalorder %v214, 512
  %vm279 = vcmp.lt.s32.totalorder %v215, 512
  %vm280 = vcmp.lt.s32.totalorder %v216, 512
  %vm281 = vcmp.lt.s32.totalorder %v217, 512
  %vm282 = vcmp.lt.s32.totalorder %v218, 512
  %vm283 = vcmp.lt.s32.totalorder %v219, 512
  %vm284 = vcmp.lt.s32.totalorder %v220, 512
  %vm285 = vcmp.lt.s32.totalorder %v221, 512
  %vm286 = vcmp.lt.s32.totalorder %v222, 512
  %vm287 = vcmp.lt.s32.totalorder %v223, 512
  %vm288 = vcmp.lt.s32.totalorder %v224, 512
  %vm289 = vcmp.lt.s32.totalorder %v225, 512
  %vm290 = vcmp.lt.s32.totalorder %v226, 512
  %vm291 = vcmp.lt.s32.totalorder %v227, 512
  %vm292 = vcmp.lt.s32.totalorder %v228, 512
  %vm293 = vcmp.lt.s32.totalorder %v229, 512
  %vm294 = vcmp.lt.s32.totalorder %v230, 512
  %vm295 = vcmp.lt.s32.totalorder %v231, 512
  %vm296 = vcmp.lt.s32.totalorder %v232, 512
  %vm297 = vcmp.lt.s32.totalorder %v233, 512
  %vm298 = vcmp.lt.s32.totalorder %v234, 512
  %vm299 = vcmp.lt.s32.totalorder %v235, 512
  %vm300 = vcmp.lt.s32.totalorder %v236, 512
  %vm301 = vcmp.lt.s32.totalorder %v237, 512
  %vm302 = vcmp.lt.s32.totalorder %v238, 512
  %vm303 = vcmp.lt.s32.totalorder %v239, 512
  %vm304 = vcmp.lt.s32.totalorder %v240, 512
  %vm305 = vcmp.lt.s32.totalorder %v241, 512
  %vm306 = vcmp.lt.s32.totalorder %v242, 512
  %vm307 = vcmp.lt.s32.totalorder %v243, 512
  %vm308 = vcmp.lt.s32.totalorder %v244, 512
  %vm309 = vcmp.lt.s32.totalorder %v245, 512
  %vm310 = vcmp.lt.s32.totalorder %v246, 512
  %vm311 = vcmp.lt.s32.totalorder %v247, 512
  %vm312 = vcmp.lt.s32.totalorder %v248, 512
  %vm313 = vcmp.lt.s32.totalorder %v249, 512
  %vm314 = vcmp.lt.s32.totalorder %v250, 512
  %vm315 = vcmp.lt.s32.totalorder %v251, 512
  %vm316 = vcmp.lt.s32.totalorder %v252, 512
  %vm317 = vcmp.lt.s32.totalorder %v253, 512
  %vm318 = vcmp.lt.s32.totalorder %v254, 512
  %vm319 = vcmp.lt.s32.totalorder %v255, 512
  %vm320 = vcmp.lt.s32.totalorder %v256, 512
  %vm321 = vcmp.lt.s32.totalorder %v257, 512
  %vm322 = vcmp.lt.s32.totalorder %v258, 512
  %vm323 = vcmp.lt.s32.totalorder %v259, 512
  %vm324 = vcmp.lt.s32.totalorder %v260, 512
  %vm325 = vcmp.lt.s32.totalorder %v261, 512
  %vm326 = vcmp.lt.s32.totalorder %v262, 512
  %vm327 = vcmp.lt.s32.totalorder %v263, 512
  %vm328 = vcmp.lt.s32.totalorder %v264, 512
  %vm329 = vcmp.lt.s32.totalorder %v265, 512
  %vm330 = vcmp.lt.s32.totalorder %v266, 512
  %vm331 = vcmp.lt.s32.totalorder %v267, 512
  %vm332 = vcmp.lt.s32.totalorder %v268, 512
  %vm333 = vcmp.lt.s32.totalorder %v269, 512
  %vm334 = vcmp.lt.s32.totalorder %v270, 512
  %vm335 = vcmp.lt.s32.totalorder %v271, 512
  %vm336 = vcmp.lt.s32.totalorder %v272, 512
  %vm337 = vcmp.lt.s32.totalorder %v273, 512
  %vm338 = vcmp.lt.s32.totalorder %v274, 512
  %v339 = vsel %vm275, %v80, 0.0
  %v340 = vsel %vm276, %v81, 0.0
  %v341 = vsel %vm277, %v82, 0.0
  %v342 = vsel %vm278, %v83, 0.0
  %v343 = vsel %vm279, %v84, 0.0
  %v344 = vsel %vm280, %v85, 0.0
  %v345 = vsel %vm281, %v86, 0.0
  %v346 = vsel %vm282, %v87, 0.0
  %v347 = vsel %vm283, %v88, 0.0
  %v348 = vsel %vm284, %v89, 0.0
  %v349 = vsel %vm285, %v90, 0.0
  %v350 = vsel %vm286, %v91, 0.0
  %v351 = vsel %vm287, %v92, 0.0
  %v352 = vsel %vm288, %v93, 0.0
  %v353 = vsel %vm289, %v94, 0.0
  %v354 = vsel %vm290, %v95, 0.0
  %v355 = vsel %vm291, %v96, 0.0
  %v356 = vsel %vm292, %v97, 0.0
  %v357 = vsel %vm293, %v98, 0.0
  %v358 = vsel %vm294, %v99, 0.0
  %v359 = vsel %vm295, %v100, 0.0
  %v360 = vsel %vm296, %v101, 0.0
  %v361 = vsel %vm297, %v102, 0.0
  %v362 = vsel %vm298, %v103, 0.0
  %v363 = vsel %vm299, %v104, 0.0
  %v364 = vsel %vm300, %v105, 0.0
  %v365 = vsel %vm301, %v106, 0.0
  %v366 = vsel %vm302, %v107, 0.0
  %v367 = vsel %vm303, %v108, 0.0
  %v368 = vsel %vm304, %v109, 0.0
  %v369 = vsel %vm305, %v110, 0.0
  %v370 = vsel %vm306, %v111, 0.0
  %v371 = vsel %vm307, %v112, 0.0
  %v372 = vsel %vm308, %v113, 0.0
  %v373 = vsel %vm309, %v114, 0.0
  %v374 = vsel %vm310, %v115, 0.0
  %v375 = vsel %vm311, %v116, 0.0
  %v376 = vsel %vm312, %v117, 0.0
  %v377 = vsel %vm313, %v118, 0.0
  %v378 = vsel %vm314, %v119, 0.0
  %v379 = vsel %vm315, %v120, 0.0
  %v380 = vsel %vm316, %v121, 0.0
  %v381 = vsel %vm317, %v122, 0.0
  %v382 = vsel %vm318, %v123, 0.0
  %v383 = vsel %vm319, %v124, 0.0
  %v384 = vsel %vm320, %v125, 0.0
  %v385 = vsel %vm321, %v126, 0.0
  %v386 = vsel %vm322, %v127, 0.0
  %v387 = vsel %vm323, %v128, 0.0
  %v388 = vsel %vm324, %v129, 0.0
  %v389 = vsel %vm325, %v130, 0.0
  %v390 = vsel %vm326, %v131, 0.0
  %v391 = vsel %vm327, %v132, 0.0
  %v392 = vsel %vm328, %v133, 0.0
  %v393 = vsel %vm329, %v134, 0.0
  %v394 = vsel %vm330, %v135, 0.0
  %v395 = vsel %vm331, %v136, 0.0
  %v396 = vsel %vm332, %v137, 0.0
  %v397 = vsel %vm333, %v138, 0.0
  %v398 = vsel %vm334, %v139, 0.0
  %v399 = vsel %vm335, %v140, 0.0
  %v400 = vsel %vm336, %v141, 0.0
  %v401 = vsel %vm337, %v142, 0.0
  %v402 = vsel %vm338, %v143, 0.0
  %v403 = vld [vmem:[%s1] sm:$0x1]
  %v404 = vadd.f32 %v339, %v340
  %v405 = vadd.f32 %v404, %v341
  %v406 = vadd.f32 %v405, %v342
  %v407 = vadd.f32 %v406, %v343
  %v408 = vadd.f32 %v407, %v344
  %v409 = vadd.f32 %v408, %v345
  %v410 = vadd.f32 %v409, %v346
  %v411 = vadd.f32 %v410, %v347
  %v412 = vadd.f32 %v411, %v348
  %v413 = vadd.f32 %v412, %v349
  %v414 = vadd.f32 %v413, %v350
  %v415 = vadd.f32 %v414, %v351
  %v416 = vadd.f32 %v415, %v352
  %v417 = vadd.f32 %v416, %v353
  %v418 = vadd.f32 %v417, %v354
  %v419 = vadd.f32 %v418, %v355
  %v420 = vadd.f32 %v419, %v356
  %v421 = vadd.f32 %v420, %v357
  %v422 = vadd.f32 %v421, %v358
  %v423 = vadd.f32 %v422, %v359
  %v424 = vadd.f32 %v423, %v360
  %v425 = vadd.f32 %v424, %v361
  %v426 = vadd.f32 %v425, %v362
  %v427 = vadd.f32 %v426, %v363
  %v428 = vadd.f32 %v427, %v364
  %v429 = vadd.f32 %v428, %v365
  %v430 = vadd.f32 %v429, %v366
  %v431 = vadd.f32 %v430, %v367
  %v432 = vadd.f32 %v431, %v368
  %v433 = vadd.f32 %v432, %v369
  %v434 = vadd.f32 %v433, %v370
  %v435 = vadd.f32 %v434, %v371
  %v436 = vadd.f32 %v435, %v372
  %v437 = vadd.f32 %v436, %v373
  %v438 = vadd.f32 %v437, %v374
  %v439 = vadd.f32 %v438, %v375
  %v440 = vadd.f32 %v439, %v376
  %v441 = vadd.f32 %v440, %v377
  %v442 = vadd.f32 %v441, %v378
  %v443 = vadd.f32 %v442, %v379
  %v444 = vadd.f32 %v443, %v380
  %v445 = vadd.f32 %v444, %v381
  %v446 = vadd.f32 %v445, %v382
  %v447 = vadd.f32 %v446, %v383
  %v448 = vadd.f32 %v447, %v384
  %v449 = vadd.f32 %v448, %v385
  %v450 = vadd.f32 %v449, %v386
  %v451 = vadd.f32 %v450, %v387
  %v452 = vadd.f32 %v451, %v388
  %v453 = vadd.f32 %v452, %v389
  %v454 = vadd.f32 %v453, %v390
  %v455 = vadd.f32 %v454, %v391
  %v456 = vadd.f32 %v455, %v392
  %v457 = vadd.f32 %v456, %v393
  %v458 = vadd.f32 %v457, %v394
  %v459 = vadd.f32 %v458, %v395
  %v460 = vadd.f32 %v459, %v396
  %v461 = vadd.f32 %v460, %v397
  %v462 = vadd.f32 %v461, %v398
  %v463 = vadd.f32 %v462, %v399
  %v464 = vadd.f32 %v463, %v400
  %v465 = vadd.f32 %v464, %v401
  %v466 = vadd.f32 %v465, %v402
  %v467 = vrot.slane %v466, 4
  %v468 = vadd.f32 %v466, %v467
  %v469 = vrot.slane %v468, 2
  %v470 = vadd.f32 %v468, %v469
  %v471 = vrot.slane %v470, 1
  %v472 = vadd.f32 %v470, %v471
  %v473 = vadd.f32 %v403, %v472
  %474 = vst [vmem:[%s1] sm:$0x1] %v473
  %v475 = vld [vmem:[%s2] sm:$0x1]
  %v476 = vmul.f32 %v339, %v339
  %v477 = vmul.f32 %v340, %v340
  %v478 = vmul.f32 %v341, %v341
  %v479 = vmul.f32 %v342, %v342
  %v480 = vmul.f32 %v343, %v343
  %v481 = vmul.f32 %v344, %v344
  %v482 = vmul.f32 %v345, %v345
  %v483 = vmul.f32 %v346, %v346
  %v484 = vmul.f32 %v347, %v347
  %v485 = vmul.f32 %v348, %v348
  %v486 = vmul.f32 %v349, %v349
  %v487 = vmul.f32 %v350, %v350
  %v488 = vmul.f32 %v351, %v351
  %v489 = vmul.f32 %v352, %v352
  %v490 = vmul.f32 %v353, %v353
  %v491 = vmul.f32 %v354, %v354
  %v492 = vmul.f32 %v355, %v355
  %v493 = vmul.f32 %v356, %v356
  %v494 = vmul.f32 %v357, %v357
  %v495 = vmul.f32 %v358, %v358
  %v496 = vmul.f32 %v359, %v359
  %v497 = vmul.f32 %v360, %v360
  %v498 = vmul.f32 %v361, %v361
  %v499 = vmul.f32 %v362, %v362
  %v500 = vmul.f32 %v363, %v363
  %v501 = vmul.f32 %v364, %v364
  %v502 = vmul.f32 %v365, %v365
  %v503 = vmul.f32 %v366, %v366
  %v504 = vmul.f32 %v367, %v367
  %v505 = vmul.f32 %v368, %v368
  %v506 = vmul.f32 %v369, %v369
  %v507 = vmul.f32 %v370, %v370
  %v508 = vmul.f32 %v371, %v371
  %v509 = vmul.f32 %v372, %v372
  %v510 = vmul.f32 %v373, %v373
  %v511 = vmul.f32 %v374, %v374
  %v512 = vmul.f32 %v375, %v375
  %v513 = vmul.f32 %v376, %v376
  %v514 = vmul.f32 %v377, %v377
  %v515 = vmul.f32 %v378, %v378
  %v516 = vmul.f32 %v379, %v379
  %v517 = vmul.f32 %v380, %v380
  %v518 = vmul.f32 %v381, %v381
  %v519 = vmul.f32 %v382, %v382
  %v520 = vmul.f32 %v383, %v383
  %v521 = vmul.f32 %v384, %v384
  %v522 = vmul.f32 %v385, %v385
  %v523 = vmul.f32 %v386, %v386
  %v524 = vmul.f32 %v387, %v387
  %v525 = vmul.f32 %v388, %v388
  %v526 = vmul.f32 %v389, %v389
  %v527 = vmul.f32 %v390, %v390
  %v528 = vmul.f32 %v391, %v391
  %v529 = vmul.f32 %v392, %v392
  %v530 = vmul.f32 %v393, %v393
  %v531 = vmul.f32 %v394, %v394
  %v532 = vmul.f32 %v395, %v395
  %v533 = vmul.f32 %v396, %v396
  %v534 = vmul.f32 %v397, %v397
  %v535 = vmul.f32 %v398, %v398
  %v536 = vmul.f32 %v399, %v399
  %v537 = vmul.f32 %v400, %v400
  %v538 = vmul.f32 %v401, %v401
  %v539 = vmul.f32 %v402, %v402
  %v540 = vadd.f32 %v476, %v477
  %v541 = vadd.f32 %v540, %v478
  %v542 = vadd.f32 %v541, %v479
  %v543 = vadd.f32 %v542, %v480
  %v544 = vadd.f32 %v543, %v481
  %v545 = vadd.f32 %v544, %v482
  %v546 = vadd.f32 %v545, %v483
  %v547 = vadd.f32 %v546, %v484
  %v548 = vadd.f32 %v547, %v485
  %v549 = vadd.f32 %v548, %v486
  %v550 = vadd.f32 %v549, %v487
  %v551 = vadd.f32 %v550, %v488
  %v552 = vadd.f32 %v551, %v489
  %v553 = vadd.f32 %v552, %v490
  %v554 = vadd.f32 %v553, %v491
  %v555 = vadd.f32 %v554, %v492
  %v556 = vadd.f32 %v555, %v493
  %v557 = vadd.f32 %v556, %v494
  %v558 = vadd.f32 %v557, %v495
  %v559 = vadd.f32 %v558, %v496
  %v560 = vadd.f32 %v559, %v497
  %v561 = vadd.f32 %v560, %v498
  %v562 = vadd.f32 %v561, %v499
  %v563 = vadd.f32 %v562, %v500
  %v564 = vadd.f32 %v563, %v501
  %v565 = vadd.f32 %v564, %v502
  %v566 = vadd.f32 %v565, %v503
  %v567 = vadd.f32 %v566, %v504
  %v568 = vadd.f32 %v567, %v505
  %v569 = vadd.f32 %v568, %v506
  %v570 = vadd.f32 %v569, %v507
  %v571 = vadd.f32 %v570, %v508
  %v572 = vadd.f32 %v571, %v509
  %v573 = vadd.f32 %v572, %v510
  %v574 = vadd.f32 %v573, %v511
  %v575 = vadd.f32 %v574, %v512
  %v576 = vadd.f32 %v575, %v513
  %v577 = vadd.f32 %v576, %v514
  %v578 = vadd.f32 %v577, %v515
  %v579 = vadd.f32 %v578, %v516
  %v580 = vadd.f32 %v579, %v517
  %v581 = vadd.f32 %v580, %v518
  %v582 = vadd.f32 %v581, %v519
  %v583 = vadd.f32 %v582, %v520
  %v584 = vadd.f32 %v583, %v521
  %v585 = vadd.f32 %v584, %v522
  %v586 = vadd.f32 %v585, %v523
  %v587 = vadd.f32 %v586, %v524
  %v588 = vadd.f32 %v587, %v525
  %v589 = vadd.f32 %v588, %v526
  %v590 = vadd.f32 %v589, %v527
  %v591 = vadd.f32 %v590, %v528
  %v592 = vadd.f32 %v591, %v529
  %v593 = vadd.f32 %v592, %v530
  %v594 = vadd.f32 %v593, %v531
  %v595 = vadd.f32 %v594, %v532
  %v596 = vadd.f32 %v595, %v533
  %v597 = vadd.f32 %v596, %v534
  %v598 = vadd.f32 %v597, %v535
  %v599 = vadd.f32 %v598, %v536
  %v600 = vadd.f32 %v599, %v537
  %v601 = vadd.f32 %v600, %v538
  %v602 = vadd.f32 %v601, %v539
  %v603 = vrot.slane %v602, 4
  %v604 = vadd.f32 %v602, %v603
  %v605 = vrot.slane %v604, 2
  %v606 = vadd.f32 %v604, %v605
  %v607 = vrot.slane %v606, 1
  %v608 = vadd.f32 %v606, %v607
  %v609 = vadd.f32 %v475, %v608
  %610 = vst [vmem:[%s2] sm:$0x1] %v609
  // Predicated region
  $region10: #{upblock_forward.6} parent=0 // pred_check
    _
  $region11: #{upblock_forward.6} parent=0 // pred_check_branch
    %612 = sbr.rel (0) target = $region13
  $region12: #{upblock_forward.6} parent=0 // pred_region
    _
  $region13: #{upblock_forward.6} parent=0 // pred_fallthru
    _
  // Predicated region
  $region14: #{upblock_forward.6} parent=0 // pred_check
    _
  $region15: #{upblock_forward.6} parent=0 // pred_check_branch
    %614 = sbr.rel (0) target = $region17
  $region16: #{upblock_forward.6} parent=0 // pred_region
    _
  $region17: #{upblock_forward.6} parent=0 // pred_fallthru
    _
  // Predicated region
  $region18: #{upblock_forward.6} parent=0 // pred_check
    _
  $region19: #{upblock_forward.6} parent=0 // pred_check_branch
    %616 = sbr.rel (0) target = $region21
  $region20: #{upblock_forward.6} parent=0 // pred_region
    _
  $region21: #{upblock_forward.6} parent=0 // pred_fallthru
    _
  // Predicated region
  $region22: #{upblock_forward.6} parent=0 // pred_check
    _
  $region23: #{upblock_forward.6} parent=0 // pred_check_branch
    %618 = sbr.rel (0) target = $region25
  $region24: #{upblock_forward.6} parent=0 // pred_region
    _
  $region25: #{upblock_forward.6} parent=0 // pred_fallthru
    _

// kernel: upblock_forward.7
$region0: #{upblock_forward.7}
  #allocation0 [shape = 'u32[]', space=smem, size = 0x4, offset = 0x4, fixed_abs, tag = 'smem constant byte address 0x4 - core index']
  #allocation1 [shape = 'u32[72,128]{1,0:T(1,128)}', space=vmem, size = 0x9000, scoped, tag = 'internal scratch']
  #allocation2 [shape = 'f32[256,128]{1,0:T(8,128)}', space=vmem, size = 0x20000, scoped, tag = 'scratch operand']
  %s0 = inlined_call_operand.vmem [shape: bf16[512,128], index: 0, kind: input, shape index: {}]
  %s1 = inlined_call_operand.vmem [shape: bf16[128,128], index: 1, kind: input, shape index: {}]
  %s2 = inlined_call_operand.vmem [shape: f32[1,128], index: 2, kind: input, shape index: {}]
  %s3 = inlined_call_operand.vmem [shape: f32[1,128], index: 3, kind: input, shape index: {}]
  %s4 = inlined_call_operand.vmem [shape: f32[1,128], index: 4, kind: input, shape index: {}]
  %s5 = inlined_call_operand.vmem [shape: f32[512,128], index: 5, kind: output, shape index: {}]
  %s6 = sld [smem:[#allocation0]]
  $region61: #{upblock_forward.7} parent=0
    _
  %s8 = ssub.s32 1, %s6
  %s9 = scalar_select 0, %s8, %s6
  loop: start=0, step=1, limit=4
  $region2: #{upblock_forward.7} parent=0 // loop_pre_header
    _
  $region3: #{upblock_forward.7} parent=0 // loop_header
    %s11 = sphi 0, %s15
    %p12 = scmp.ge.s32.totalorder %s11, 4
    %s18 = sphi 0, %s37
    %s19 = sphi 0, %s33
    %s20 = sphi 0, %s29
    %s21 = sphi 0, %s18
    %s22 = sphi 0, %s19
    %s23 = sphi 0, %s20
    %s24 = sphi 0, %s21
    %s25 = sphi 0, %s22
    %s26 = sphi 0, %s23
    %s42 = sphi 0, %s44
    %s45 = sphi 0, %s42
    %s46 = sphi 0, %s45
    %s62 = sphi 0, %s46
    %s70 = sphi 0, %s72
    %s73 = sphi 0, %s70
    %s74 = sphi 0, %s73
    %s90 = sphi 0, %s74
    %s96 = sphi 0, %s98
    %s99 = sphi 0, %s96
    %s100 = sphi 0, %s99
    %s116 = sphi 0, %s100
    %s122 = sphi 0, %s124
    %s125 = sphi 0, %s122
    %s126 = sphi 0, %s125
    %s142 = sphi 0, %s126
    %s148 = sphi 0, %s150
    %s151 = sphi 0, %s148
    %s152 = sphi 0, %s151
    %s168 = sphi 0, %s152
    %s176 = sphi 0, %s178
    %s179 = sphi 0, %s176
    %s180 = sphi 0, %s179
    %s196 = sphi 0, %s180
  $region4: #{upblock_forward.7} parent=0 // loop_header_branch
    %14 = sbr.rel (%p12) target = $region8
  $region5: #{upblock_forward.7} parent=0 // loop_body
    %s16 = ssub.s32 %s11, 1
    %s17 = ssub.s32 %s11, 2
    %s27 = sadd.s32 1, %s20
    %p28 = scmp.ge.s32.totalorder %s27, 1
    %s29 = scalar_select %p28, 0, %s27
    %s30 = sadd.s32 1, %s19
    %s31 = scalar_select %p28, %s30, %s19
    %p32 = scmp.ge.s32.totalorder %s31, 1
    %s33 = scalar_select %p32, 0, %s31
    %s34 = sadd.s32 1, %s18
    %s35 = scalar_select %p32, %s34, %s18
    %p36 = scmp.ge.s32.totalorder %s35, 2
    %s37 = scalar_select %p36, 0, %s35
    %s38 = ssub.s32 %s18, %s37
    %s39 = ssub.s32 %s20, %s29
    %s40 = sor.u32 %s38, %s39
    %p41 = scmp.eq.s32.totalorder %s40, 0
    %s43 = sadd.s32 %s42, 1
    %s44 = scalar_select %p41, %s42, %s43
    %p47 = pneg %p41
    %p48 = scmp.eq.s32.totalorder %s11, 1
    %p49 = por %p47, %p48
    %p50 = scmp.ne.s32.totalorder %s42, %s45
    %p51 = scmp.eq.s32.totalorder %s11, 0
    %p52 = por %p50, %p51
    %p53 = scmp.ne.s32.totalorder %s42, %s45
    %p54 = scmp.eq.s32.totalorder %s16, 1
    %p55 = por %p53, %p54
    %p56 = scmp.ne.s32.totalorder %s45, %s46
    %p57 = scmp.eq.s32.totalorder %s16, 0
    %p58 = por %p56, %p57
    %p59 = scmp.ne.s32.totalorder %s45, %s46
    %p60 = scmp.eq.s32.totalorder %s17, 1
    %p61 = por %p59, %p60
    %p63 = scmp.ne.s32.totalorder %s46, %s62
    %p64 = scmp.eq.s32.totalorder %s17, 0
    %p65 = por %p63, %p64
    %s66 = ssub.s32 %s20, %s29
    %s67 = ssub.s32 %s19, %s33
    %s68 = sor.u32 %s66, %s67
    %p69 = scmp.eq.s32.totalorder %s68, 0
    %s71 = sadd.s32 %s70, 1
    %s72 = scalar_select %p69, %s70, %s71
    %p75 = pneg %p69
    %p76 = scmp.eq.s32.totalorder %s11, 1
    %p77 = por %p75, %p76
    %p78 = scmp.ne.s32.totalorder %s70, %s73
    %p79 = scmp.eq.s32.totalorder %s11, 0
    %p80 = por %p78, %p79
    %p81 = scmp.ne.s32.totalorder %s70, %s73
    %p82 = scmp.eq.s32.totalorder %s16, 1
    %p83 = por %p81, %p82
    %p84 = scmp.ne.s32.totalorder %s73, %s74
    %p85 = scmp.eq.s32.totalorder %s16, 0
    %p86 = por %p84, %p85
    %p87 = scmp.ne.s32.totalorder %s73, %s74
    %p88 = scmp.eq.s32.totalorder %s17, 1
    %p89 = por %p87, %p88
    %p91 = scmp.ne.s32.totalorder %s74, %s90
    %p92 = scmp.eq.s32.totalorder %s17, 0
    %p93 = por %p91, %p92
    %s94 = ssub.s32 %s19, %s33
    %p95 = scmp.eq.s32.totalorder %s94, 0
    %s97 = sadd.s32 %s96, 1
    %s98 = scalar_select %p95, %s96, %s97
    %p101 = pneg %p95
    %p102 = scmp.eq.s32.totalorder %s11, 1
    %p103 = por %p101, %p102
    %p104 = scmp.ne.s32.totalorder %s96, %s99
    %p105 = scmp.eq.s32.totalorder %s11, 0
    %p106 = por %p104, %p105
    %p107 = scmp.ne.s32.totalorder %s96, %s99
    %p108 = scmp.eq.s32.totalorder %s16, 1
    %p109 = por %p107, %p108
    %p110 = scmp.ne.s32.totalorder %s99, %s100
    %p111 = scmp.eq.s32.totalorder %s16, 0
    %p112 = por %p110, %p111
    %p113 = scmp.ne.s32.totalorder %s99, %s100
    %p114 = scmp.eq.s32.totalorder %s17, 1
    %p115 = por %p113, %p114
    %p117 = scmp.ne.s32.totalorder %s100, %s116
    %p118 = scmp.eq.s32.totalorder %s17, 0
    %p119 = por %p117, %p118
    %s120 = ssub.s32 %s20, %s29
    %p121 = scmp.eq.s32.totalorder %s120, 0
    %s123 = sadd.s32 %s122, 1
    %s124 = scalar_select %p121, %s122, %s123
    %p127 = pneg %p121
    %p128 = scmp.eq.s32.totalorder %s11, 1
    %p129 = por %p127, %p128
    %p130 = scmp.ne.s32.totalorder %s122, %s125
    %p131 = scmp.eq.s32.totalorder %s11, 0
    %p132 = por %p130, %p131
    %p133 = scmp.ne.s32.totalorder %s122, %s125
    %p134 = scmp.eq.s32.totalorder %s16, 1
    %p135 = por %p133, %p134
    %p136 = scmp.ne.s32.totalorder %s125, %s126
    %p137 = scmp.eq.s32.totalorder %s16, 0
    %p138 = por %p136, %p137
    %p139 = scmp.ne.s32.totalorder %s125, %s126
    %p140 = scmp.eq.s32.totalorder %s17, 1
    %p141 = por %p139, %p140
    %p143 = scmp.ne.s32.totalorder %s126, %s142
    %p144 = scmp.eq.s32.totalorder %s17, 0
    %p145 = por %p143, %p144
    %s146 = ssub.s32 %s20, %s29
    %p147 = scmp.eq.s32.totalorder %s146, 0
    %s149 = sadd.s32 %s148, 1
    %s150 = scalar_select %p147, %s148, %s149
    %p153 = pneg %p147
    %p154 = scmp.eq.s32.totalorder %s11, 1
    %p155 = por %p153, %p154
    %p156 = scmp.ne.s32.totalorder %s148, %s151
    %p157 = scmp.eq.s32.totalorder %s11, 0
    %p158 = por %p156, %p157
    %p159 = scmp.ne.s32.totalorder %s148, %s151
    %p160 = scmp.eq.s32.totalorder %s16, 1
    %p161 = por %p159, %p160
    %p162 = scmp.ne.s32.totalorder %s151, %s152
    %p163 = scmp.eq.s32.totalorder %s16, 0
    %p164 = por %p162, %p163
    %p165 = scmp.ne.s32.totalorder %s151, %s152
    %p166 = scmp.eq.s32.totalorder %s17, 1
    %p167 = por %p165, %p166
    %p169 = scmp.ne.s32.totalorder %s152, %s168
    %p170 = scmp.eq.s32.totalorder %s17, 0
    %p171 = por %p169, %p170
    %s172 = ssub.s32 %s18, %s37
    %s173 = ssub.s32 %s19, %s33
    %s174 = sor.u32 %s172, %s173
    %p175 = scmp.eq.s32.totalorder %s174, 0
    %s177 = sadd.s32 %s176, 1
    %s178 = scalar_select %p175, %s176, %s177
    %p181 = pneg %p175
    %p182 = scmp.eq.s32.totalorder %s11, 1
    %p183 = por %p181, %p182
    %p184 = scmp.ne.s32.totalorder %s176, %s179
    %p185 = scmp.eq.s32.totalorder %s11, 0
    %p186 = por %p184, %p185
    %p187 = scmp.ne.s32.totalorder %s176, %s179
    %p188 = scmp.eq.s32.totalorder %s16, 1
    %p189 = por %p187, %p188
    %p190 = scmp.ne.s32.totalorder %s179, %s180
    %p191 = scmp.eq.s32.totalorder %s16, 0
    %p192 = por %p190, %p191
    %p193 = scmp.ne.s32.totalorder %s179, %s180
    %p194 = scmp.eq.s32.totalorder %s17, 1
    %p195 = por %p193, %p194
    %p197 = scmp.ne.s32.totalorder %s180, %s196
    %p198 = scmp.eq.s32.totalorder %s17, 0
    %p199 = por %p197, %p198
    %p200 = scmp.le.s32.totalorder 1, %s11
    %p201 = scmp.lt.s32.totalorder %s11, 3
    %p202 = pnand %p200, %p201
    %p203 = pneg %p202
    // Predicated region
    $region9: #{upblock_forward.7} parent=5 // pred_check
      _
    $region10: #{upblock_forward.7} parent=5 // pred_check_branch
      %205 = sbr.rel (%p202) target = $region12
    $region11: #{upblock_forward.7} parent=5 // pred_region
      %s206 = ssub.s32 %s11, 1
      // Predicated region
      $region13: #{upblock_forward.7} parent=11 // pred_check
        %p207 = pneg %p86
      $region14: #{upblock_forward.7} parent=11 // pred_check_branch
        %209 = sbr.rel (%p207) target = $region16
      $region15: #{upblock_forward.7} parent=11 // pred_region
        %s210 = smul.u32 16, %s23
        %p211 = scmp.lt.s32.totalorder %s210, 15
        %s212 = scalar_select %p211, %s210, 15
        %p213 = scmp.lt.s32.totalorder %s22, 0
        %s214 = scalar_select %p213, %s22, 0
        %s215 = sadd.s32 %s214, %s212
        %s216 = smul.addr %s215, 4
        %s217 = scalar_lea.vmem %s1, %s216
        %s218 = smul.u32 16, %s23
      $region16: #{upblock_forward.7} parent=11 // pred_fallthru
        _
      // Predicated region
      $region17: #{upblock_forward.7} parent=11 // pred_check
        %p219 = pneg %p112
      $region18: #{upblock_forward.7} parent=11 // pred_check_branch
        %221 = sbr.rel (%p219) target = $region20
      $region19: #{upblock_forward.7} parent=11 // pred_region
        %p222 = scmp.lt.s32.totalorder %s22, 0
        %s223 = scalar_select %p222, %s22, 0
        %s224 = scalar_lea.vmem %s2, %s223
      $region20: #{upblock_forward.7} parent=11 // pred_fallthru
        _
      // Predicated region
      $region21: #{upblock_forward.7} parent=11 // pred_check
        %p225 = pneg %p138
      $region22: #{upblock_forward.7} parent=11 // pred_check_branch
        %227 = sbr.rel (%p225) target = $region24
      $region23: #{upblock_forward.7} parent=11 // pred_region
        %p228 = scmp.lt.s32.totalorder %s23, 0
        %s229 = scalar_select %p228, %s23, 0
        %s230 = scalar_lea.vmem %s3, %s229
      $region24: #{upblock_forward.7} parent=11 // pred_fallthru
        _
      // Predicated region
      $region25: #{upblock_forward.7} parent=11 // pred_check
        %p231 = pneg %p164
      $region26: #{upblock_forward.7} parent=11 // pred_check_branch
        %233 = sbr.rel (%p231) target = $region28
      $region27: #{upblock_forward.7} parent=11 // pred_region
        %p234 = scmp.lt.s32.totalorder %s23, 0
        %s235 = scalar_select %p234, %s23, 0
        %s236 = scalar_lea.vmem %s4, %s235
      $region28: #{upblock_forward.7} parent=11 // pred_fallthru
        _
    $region12: #{upblock_forward.7} parent=5 // pred_fallthru
      _
    %p237 = scmp.lt.s32.totalorder %s11, 2
    // Predicated region
    $region29: #{upblock_forward.7} parent=5 // pred_check
      %p238 = pneg %p237
    $region30: #{upblock_forward.7} parent=5 // pred_check_branch
      %240 = sbr.rel (%p238) target = $region32
    $region31: #{upblock_forward.7} parent=5 // pred_region
      // Predicated region
      $region33: #{upblock_forward.7} parent=31 // pred_check
        %p241 = pneg %p52
      $region34: #{upblock_forward.7} parent=31 // pred_check_branch
        %243 = sbr.rel (%p241) target = $region36
      $region35: #{upblock_forward.7} parent=31 // pred_region
        %s244 = smul.u32 32, %s18
        %p245 = scmp.lt.s32.totalorder %s244, 63
        %s246 = scalar_select %p245, %s244, 63
        %p247 = scmp.lt.s32.totalorder %s20, 0
        %s248 = scalar_select %p247, %s20, 0
        %s249 = sadd.s32 %s248, %s246
        %s250 = smul.addr %s249, 4
        %s251 = scalar_lea.vmem %s0, %s250
        %s252 = smul.u32 32, %s18
      $region36: #{upblock_forward.7} parent=31 // pred_fallthru
        _
    $region32: #{upblock_forward.7} parent=5 // pred_fallthru
      _
    %p253 = scmp.le.s32.totalorder 1, %s11
    %p254 = scmp.lt.s32.totalorder %s11, 3
    %p255 = pnand %p253, %p254
    %p256 = pneg %p255
    // Predicated region
    $region37: #{upblock_forward.7} parent=5 // pred_check
      _
    $region38: #{upblock_forward.7} parent=5 // pred_check_branch
      %258 = sbr.rel (%p255) target = $region40
    $region39: #{upblock_forward.7} parent=5 // pred_region
      %s259 = ssub.s32 %s11, 1
      %s260 = smul.u32 32, %s21
      %p261 = scmp.lt.s32.totalorder %s260, 63
      %s262 = scalar_select %p261, %s260, 63
      %p263 = scmp.lt.s32.totalorder %s23, 0
      %s264 = scalar_select %p263, %s23, 0
      %s265 = sadd.s32 %s264, %s262
      %s266 = smul.addr %s265, 4
      %s267 = scalar_lea.vmem %s0, %s266
      %p268 = pneg %p58
      %p269 = pneg %p55
      %s270 = smul.u32 16, %s23
      %p271 = scmp.lt.s32.totalorder %s270, 15
      %s272 = scalar_select %p271, %s270, 15
      %p273 = scmp.lt.s32.totalorder %s22, 0
      %s274 = scalar_select %p273, %s22, 0
      %s275 = sadd.s32 %s274, %s272
      %s276 = smul.addr %s275, 4
      %s277 = scalar_lea.vmem %s1, %s276
      %p278 = pneg %p86
      %p279 = pneg %p83
      %p280 = scmp.lt.s32.totalorder %s22, 0
      %s281 = scalar_select %p280, %s22, 0
      %s282 = scalar_lea.vmem %s2, %s281
      %p283 = pneg %p112
      %p284 = pneg %p109
      %p285 = scmp.lt.s32.totalorder %s23, 0
      %s286 = scalar_select %p285, %s23, 0
      %s287 = scalar_lea.vmem %s3, %s286
      %p288 = pneg %p138
      %p289 = pneg %p135
      %p290 = scmp.lt.s32.totalorder %s23, 0
      %s291 = scalar_select %p290, %s23, 0
      %s292 = scalar_lea.vmem %s4, %s291
      %p293 = pneg %p164
      %p294 = pneg %p161
      %p295 = pneg %p192
      %p296 = pneg %p189
      %s297 = smul.u32 32, %s21
      %p298 = scmp.lt.s32.totalorder %s297, 63
      %s299 = scalar_select %p298, %s297, 63
      %p300 = scmp.lt.s32.totalorder %s22, 0
      %s301 = scalar_select %p300, %s22, 0
      %s302 = sadd.s32 %s301, %s299
      %s303 = smul.addr %s302, 8
      %s304 = scalar_lea.vmem %s5, %s303
      %s305 = smul.u32 32, %s21
      %p306 = scmp.lt.s32.totalorder %s305, 63
      %s307 = scalar_select %p306, %s305, 63
      %p308 = scmp.lt.s32.totalorder %s23, 0
      %s309 = scalar_select %p308, %s23, 0
      %s310 = sadd.s32 %s309, %s307
      %s311 = smul.addr %s310, 4
      %s312 = scalar_lea.vmem %s0, %s311
      %s313 = smul.u32 32, %s21
      %s314 = smul.u32 16, %s23
      %p315 = scmp.lt.s32.totalorder %s314, 15
      %s316 = scalar_select %p315, %s314, 15
      %p317 = scmp.lt.s32.totalorder %s22, 0
      %s318 = scalar_select %p317, %s22, 0
      %s319 = sadd.s32 %s318, %s316
      %s320 = smul.addr %s319, 4
      %s321 = scalar_lea.vmem %s1, %s320
      %s322 = smul.u32 16, %s23
      %p323 = scmp.lt.s32.totalorder %s22, 0
      %s324 = scalar_select %p323, %s22, 0
      %s325 = scalar_lea.vmem %s2, %s324
      %p326 = scmp.lt.s32.totalorder %s23, 0
      %s327 = scalar_select %p326, %s23, 0
      %s328 = scalar_lea.vmem %s3, %s327
      %p329 = scmp.lt.s32.totalorder %s23, 0
      %s330 = scalar_select %p329, %s23, 0
      %s331 = scalar_lea.vmem %s4, %s330
      %s332 = smul.u32 32, %s21
      %p333 = scmp.lt.s32.totalorder %s332, 63
      %s334 = scalar_select %p333, %s332, 63
      %p335 = scmp.lt.s32.totalorder %s22, 0
      %s336 = scalar_select %p335, %s22, 0
      %s337 = sadd.s32 %s336, %s334
      %s338 = smul.addr %s337, 8
      %s339 = scalar_lea.vmem %s5, %s338
      %s340 = smul.u32 32, %s21
      %p341 = scmp.eq.s32.totalorder %s23, 0
      // Predicated region
      $region41: #{upblock_forward.7} parent=39 // pred_check
        %p342 = pneg %p341
      $region42: #{upblock_forward.7} parent=39 // pred_check_branch
        %344 = sbr.rel (%p342) target = $region44
      $region43: #{upblock_forward.7} parent=39 // pred_region
        %345 = vst [vmem:[#allocation2] sm:$0xff] 0.0
        %346 = vst [vmem:[#allocation2 + $0x8] sm:$0xff] 0.0
        %347 = vst [vmem:[#allocation2 + $0x10] sm:$0xff] 0.0
        %348 = vst [vmem:[#allocation2 + $0x18] sm:$0xff] 0.0
        %349 = vst [vmem:[#allocation2 + $0x20] sm:$0xff] 0.0
        %350 = vst [vmem:[#allocation2 + $0x28] sm:$0xff] 0.0
        %351 = vst [vmem:[#allocation2 + $0x30] sm:$0xff] 0.0
        %352 = vst [vmem:[#allocation2 + $0x38] sm:$0xff] 0.0
        %353 = vst [vmem:[#allocation2 + $0x40] sm:$0xff] 0.0
        %354 = vst [vmem:[#allocation2 + $0x48] sm:$0xff] 0.0
        %355 = vst [vmem:[#allocation2 + $0x50] sm:$0xff] 0.0
        %356 = vst [vmem:[#allocation2 + $0x58] sm:$0xff] 0.0
        %357 = vst [vmem:[#allocation2 + $0x60] sm:$0xff] 0.0
        %358 = vst [vmem:[#allocation2 + $0x68] sm:$0xff] 0.0
        %359 = vst [vmem:[#allocation2 + $0x70] sm:$0xff] 0.0
        %360 = vst [vmem:[#allocation2 + $0x78] sm:$0xff] 0.0
        %361 = vst [vmem:[#allocation2 + $0x80] sm:$0xff] 0.0
        %362 = vst [vmem:[#allocation2 + $0x88] sm:$0xff] 0.0
        %363 = vst [vmem:[#allocation2 + $0x90] sm:$0xff] 0.0
        %364 = vst [vmem:[#allocation2 + $0x98] sm:$0xff] 0.0
        %365 = vst [vmem:[#allocation2 + $0xa0] sm:$0xff] 0.0
        %366 = vst [vmem:[#allocation2 + $0xa8] sm:$0xff] 0.0
        %367 = vst [vmem:[#allocation2 + $0xb0] sm:$0xff] 0.0
        %368 = vst [vmem:[#allocation2 + $0xb8] sm:$0xff] 0.0
        %369 = vst [vmem:[#allocation2 + $0xc0] sm:$0xff] 0.0
        %370 = vst [vmem:[#allocation2 + $0xc8] sm:$0xff] 0.0
        %371 = vst [vmem:[#allocation2 + $0xd0] sm:$0xff] 0.0
        %372 = vst [vmem:[#allocation2 + $0xd8] sm:$0xff] 0.0
        %373 = vst [vmem:[#allocation2 + $0xe0] sm:$0xff] 0.0
        %374 = vst [vmem:[#allocation2 + $0xe8] sm:$0xff] 0.0
        %375 = vst [vmem:[#allocation2 + $0xf0] sm:$0xff] 0.0
        %376 = vst [vmem:[#allocation2 + $0xf8] sm:$0xff] 0.0
      $region44: #{upblock_forward.7} parent=39 // pred_fallthru
        _
      %v377 = vld [vmem:[%s312] sm:$0xf]
      %v378 = vld [vmem:[%s312 + $0x4] sm:$0xf]
      %v379 = vld [vmem:[%s312 + $0x8] sm:$0xf]
      %v380 = vld [vmem:[%s312 + $0xc] sm:$0xf]
      %v381 = vld [vmem:[%s312 + $0x10] sm:$0xf]
      %v382 = vld [vmem:[%s312 + $0x14] sm:$0xf]
      %v383 = vld [vmem:[%s312 + $0x18] sm:$0xf]
      %v384 = vld [vmem:[%s312 + $0x1c] sm:$0xf]
      %v385 = vld [vmem:[%s312 + $0x20] sm:$0xf]
      %v386 = vld [vmem:[%s312 + $0x24] sm:$0xf]
      %v387 = vld [vmem:[%s312 + $0x28] sm:$0xf]
      %v388 = vld [vmem:[%s312 + $0x2c] sm:$0xf]
      %v389 = vld [vmem:[%s312 + $0x30] sm:$0xf]
      %v390 = vld [vmem:[%s312 + $0x34] sm:$0xf]
      %v391 = vld [vmem:[%s312 + $0x38] sm:$0xf]
      %v392 = vld [vmem:[%s312 + $0x3c] sm:$0xf]
      %v393 = vld [vmem:[%s312 + $0x40] sm:$0xf]
      %v394 = vld [vmem:[%s312 + $0x44] sm:$0xf]
      %v395 = vld [vmem:[%s312 + $0x48] sm:$0xf]
      %v396 = vld [vmem:[%s312 + $0x4c] sm:$0xf]
      %v397 = vld [vmem:[%s312 + $0x50] sm:$0xf]
      %v398 = vld [vmem:[%s312 + $0x54] sm:$0xf]
      %v399 = vld [vmem:[%s312 + $0x58] sm:$0xf]
      %v400 = vld [vmem:[%s312 + $0x5c] sm:$0xf]
      %v401 = vld [vmem:[%s312 + $0x60] sm:$0xf]
      %v402 = vld [vmem:[%s312 + $0x64] sm:$0xf]
      %v403 = vld [vmem:[%s312 + $0x68] sm:$0xf]
      %v404 = vld [vmem:[%s312 + $0x6c] sm:$0xf]
      %v405 = vld [vmem:[%s312 + $0x70] sm:$0xf]
      %v406 = vld [vmem:[%s312 + $0x74] sm:$0xf]
      %v407 = vld [vmem:[%s312 + $0x78] sm:$0xf]
      %v408 = vld [vmem:[%s312 + $0x7c] sm:$0xf]
      %v409 = vunpack.c.l.bf16 %v377
      %v410 = vunpack.c.l.bf16 %v378
      %v411 = vunpack.c.l.bf16 %v379
      %v412 = vunpack.c.l.bf16 %v380
      %v413 = vunpack.c.l.bf16 %v381
      %v414 = vunpack.c.l.bf16 %v382
      %v415 = vunpack.c.l.bf16 %v383
      %v416 = vunpack.c.l.bf16 %v384
      %v417 = vunpack.c.l.bf16 %v385
      %v418 = vunpack.c.l.bf16 %v386
      %v419 = vunpack.c.l.bf16 %v387
      %v420 = vunpack.c.l.bf16 %v388
      %v421 = vunpack.c.l.bf16 %v389
      %v422 = vunpack.c.l.bf16 %v390
      %v423 = vunpack.c.l.bf16 %v391
      %v424 = vunpack.c.l.bf16 %v392
      %v425 = vunpack.c.l.bf16 %v393
      %v426 = vunpack.c.l.bf16 %v394
      %v427 = vunpack.c.l.bf16 %v395
      %v428 = vunpack.c.l.bf16 %v396
      %v429 = vunpack.c.l.bf16 %v397
      %v430 = vunpack.c.l.bf16 %v398
      %v431 = vunpack.c.l.bf16 %v399
      %v432 = vunpack.c.l.bf16 %v400
      %v433 = vunpack.c.l.bf16 %v401
      %v434 = vunpack.c.l.bf16 %v402
      %v435 = vunpack.c.l.bf16 %v403
      %v436 = vunpack.c.l.bf16 %v404
      %v437 = vunpack.c.l.bf16 %v405
      %v438 = vunpack.c.l.bf16 %v406
      %v439 = vunpack.c.l.bf16 %v407
      %v440 = vunpack.c.l.bf16 %v408
      %v441 = vld [vmem:[%s328] sm:$0x1]
      %v443 = vperm.slane %v441, 0
      %v445 = vmul.f32 %v409, %v443
      %v446 = vmul.f32 %v410, %v443
      %v447 = vmul.f32 %v411, %v443
      %v448 = vmul.f32 %v412, %v443
      %v449 = vmul.f32 %v413, %v443
      %v450 = vmul.f32 %v414, %v443
      %v451 = vmul.f32 %v415, %v443
      %v452 = vmul.f32 %v416, %v443
      %v453 = vmul.f32 %v417, %v443
      %v454 = vmul.f32 %v418, %v443
      %v455 = vmul.f32 %v419, %v443
      %v456 = vmul.f32 %v420, %v443
      %v457 = vmul.f32 %v421, %v443
      %v458 = vmul.f32 %v422, %v443
      %v459 = vmul.f32 %v423, %v443
      %v460 = vmul.f32 %v424, %v443
      %v461 = vmul.f32 %v425, %v443
      %v462 = vmul.f32 %v426, %v443
      %v463 = vmul.f32 %v427, %v443
      %v464 = vmul.f32 %v428, %v443
      %v465 = vmul.f32 %v429, %v443
      %v466 = vmul.f32 %v430, %v443
      %v467 = vmul.f32 %v431, %v443
      %v468 = vmul.f32 %v432, %v443
      %v469 = vmul.f32 %v433, %v443
      %v470 = vmul.f32 %v434, %v443
      %v471 = vmul.f32 %v435, %v443
      %v472 = vmul.f32 %v436, %v443
      %v473 = vmul.f32 %v437, %v443
      %v474 = vmul.f32 %v438, %v443
      %v475 = vmul.f32 %v439, %v443
      %v476 = vmul.f32 %v440, %v443
      %v477 = vld [vmem:[%s331] sm:$0x1]
      %v479 = vperm.slane %v477, 0
      %v481 = vadd.f32 %v445, %v479
      %v482 = vadd.f32 %v446, %v479
      %v483 = vadd.f32 %v447, %v479
      %v484 = vadd.f32 %v448, %v479
      %v485 = vadd.f32 %v449, %v479
      %v486 = vadd.f32 %v450, %v479
      %v487 = vadd.f32 %v451, %v479
      %v488 = vadd.f32 %v452, %v479
      %v489 = vadd.f32 %v453, %v479
      %v490 = vadd.f32 %v454, %v479
      %v491 = vadd.f32 %v455, %v479
      %v492 = vadd.f32 %v456, %v479
      %v493 = vadd.f32 %v457, %v479
      %v494 = vadd.f32 %v458, %v479
      %v495 = vadd.f32 %v459, %v479
      %v496 = vadd.f32 %v460, %v479
      %v497 = vadd.f32 %v461, %v479
      %v498 = vadd.f32 %v462, %v479
      %v499 = vadd.f32 %v463, %v479
      %v500 = vadd.f32 %v464, %v479
      %v501 = vadd.f32 %v465, %v479
      %v502 = vadd.f32 %v466, %v479
      %v503 = vadd.f32 %v467, %v479
      %v504 = vadd.f32 %v468, %v479
      %v505 = vadd.f32 %v469, %v479
      %v506 = vadd.f32 %v470, %v479
      %v507 = vadd.f32 %v471, %v479
      %v508 = vadd.f32 %v472, %v479
      %v509 = vadd.f32 %v473, %v479
      %v510 = vadd.f32 %v474, %v479
      %v511 = vadd.f32 %v475, %v479
      %v512 = vadd.f32 %v476, %v479
      %v513 = vmax.f32 %v481, 0.0
      %v514 = vmax.f32 %v482, 0.0
      %v515 = vmax.f32 %v483, 0.0
      %v516 = vmax.f32 %v484, 0.0
      %v517 = vmax.f32 %v485, 0.0
      %v518 = vmax.f32 %v486, 0.0
      %v519 = vmax.f32 %v487, 0.0
      %v520 = vmax.f32 %v488, 0.0
      %v521 = vmax.f32 %v489, 0.0
      %v522 = vmax.f32 %v490, 0.0
      %v523 = vmax.f32 %v491, 0.0
      %v524 = vmax.f32 %v492, 0.0
      %v525 = vmax.f32 %v493, 0.0
      %v526 = vmax.f32 %v494, 0.0
      %v527 = vmax.f32 %v495, 0.0
      %v528 = vmax.f32 %v496, 0.0
      %v529 = vmax.f32 %v497, 0.0
      %v530 = vmax.f32 %v498, 0.0
      %v531 = vmax.f32 %v499, 0.0
      %v532 = vmax.f32 %v500, 0.0
      %v533 = vmax.f32 %v501, 0.0
      %v534 = vmax.f32 %v502, 0.0
      %v535 = vmax.f32 %v503, 0.0
      %v536 = vmax.f32 %v504, 0.0
      %v537 = vmax.f32 %v505, 0.0
      %v538 = vmax.f32 %v506, 0.0
      %v539 = vmax.f32 %v507, 0.0
      %v540 = vmax.f32 %v508, 0.0
      %v541 = vmax.f32 %v509, 0.0
      %v542 = vmax.f32 %v510, 0.0
      %v543 = vmax.f32 %v511, 0.0
      %v544 = vmax.f32 %v512, 0.0
      %v545 = vpack.c.bf16 %v514, %v513
      %v546 = vpack.c.bf16 %v516, %v515
      %v547 = vpack.c.bf16 %v518, %v517
      %v548 = vpack.c.bf16 %v520, %v519
      %v549 = vpack.c.bf16 %v522, %v521
      %v550 = vpack.c.bf16 %v524, %v523
      %v551 = vpack.c.bf16 %v526, %v525
      %v552 = vpack.c.bf16 %v528, %v527
      %v553 = vpack.c.bf16 %v530, %v529
      %v554 = vpack.c.bf16 %v532, %v531
      %v555 = vpack.c.bf16 %v534, %v533
      %v556 = vpack.c.bf16 %v536, %v535
      %v557 = vpack.c.bf16 %v538, %v537
      %v558 = vpack.c.bf16 %v540, %v539
      %v559 = vpack.c.bf16 %v542, %v541
      %v560 = vpack.c.bf16 %v544, %v543
      %v561 = vld [vmem:[#allocation2] sm:$0xff]
      %v562 = vld [vmem:[#allocation2 + $0x8] sm:$0xff]
      %v563 = vld [vmem:[#allocation2 + $0x10] sm:$0xff]
      %v564 = vld [vmem:[#allocation2 + $0x18] sm:$0xff]
      %v565 = vld [vmem:[#allocation2 + $0x20] sm:$0xff]
      %v566 = vld [vmem:[#allocation2 + $0x28] sm:$0xff]
      %v567 = vld [vmem:[#allocation2 + $0x30] sm:$0xff]
      %v568 = vld [vmem:[#allocation2 + $0x38] sm:$0xff]
      %v569 = vld [vmem:[#allocation2 + $0x40] sm:$0xff]
      %v570 = vld [vmem:[#allocation2 + $0x48] sm:$0xff]
      %v571 = vld [vmem:[#allocation2 + $0x50] sm:$0xff]
      %v572 = vld [vmem:[#allocation2 + $0x58] sm:$0xff]
      %v573 = vld [vmem:[#allocation2 + $0x60] sm:$0xff]
      %v574 = vld [vmem:[#allocation2 + $0x68] sm:$0xff]
      %v575 = vld [vmem:[#allocation2 + $0x70] sm:$0xff]
      %v576 = vld [vmem:[#allocation2 + $0x78] sm:$0xff]
      %v577 = vld [vmem:[#allocation2 + $0x80] sm:$0xff]
      %v578 = vld [vmem:[#allocation2 + $0x88] sm:$0xff]
      %v579 = vld [vmem:[#allocation2 + $0x90] sm:$0xff]
      %v580 = vld [vmem:[#allocation2 + $0x98] sm:$0xff]
      %v581 = vld [vmem:[#allocation2 + $0xa0] sm:$0xff]
      %v582 = vld [vmem:[#allocation2 + $0xa8] sm:$0xff]
      %v583 = vld [vmem:[#allocation2 + $0xb0] sm:$0xff]
      %v584 = vld [vmem:[#allocation2 + $0xb8] sm:$0xff]
      %v585 = vld [vmem:[#allocation2 + $0xc0] sm:$0xff]
      %v586 = vld [vmem:[#allocation2 + $0xc8] sm:$0xff]
      %v587 = vld [vmem:[#allocation2 + $0xd0] sm:$0xff]
      %v588 = vld [vmem:[#allocation2 + $0xd8] sm:$0xff]
      %v589 = vld [vmem:[#allocation2 + $0xe0] sm:$0xff]
      %v590 = vld [vmem:[#allocation2 + $0xe8] sm:$0xff]
      %v591 = vld [vmem:[#allocation2 + $0xf0] sm:$0xff]
      %v592 = vld [vmem:[#allocation2 + $0xf8] sm:$0xff]
      %v593 = vld [vmem:[%s321] sm:$0xf]
      %v594 = vld [vmem:[%s321 + $0x4] sm:$0xf]
      %v595 = vld [vmem:[%s321 + $0x8] sm:$0xf]
      %v596 = vld [vmem:[%s321 + $0xc] sm:$0xf]
      %v597 = vld [vmem:[%s321 + $0x10] sm:$0xf]
      %v598 = vld [vmem:[%s321 + $0x14] sm:$0xf]
      %v599 = vld [vmem:[%s321 + $0x18] sm:$0xf]
      %v600 = vld [vmem:[%s321 + $0x1c] sm:$0xf]
      %v601 = vld [vmem:[%s321 + $0x20] sm:$0xf]
      %v602 = vld [vmem:[%s321 + $0x24] sm:$0xf]
      %v603 = vld [vmem:[%s321 + $0x28] sm:$0xf]
      %v604 = vld [vmem:[%s321 + $0x2c] sm:$0xf]
      %v605 = vld [vmem:[%s321 + $0x30] sm:$0xf]
      %v606 = vld [vmem:[%s321 + $0x34] sm:$0xf]
      %v607 = vld [vmem:[%s321 + $0x38] sm:$0xf]
      %v608 = vld [vmem:[%s321 + $0x3c] sm:$0xf]
      %v625 = vunpack.c.l.b16 %v593
      %v626 = vunpack.c.l.b16 %v594
      %v627 = vunpack.c.l.b16 %v595
      %v628 = vunpack.c.l.b16 %v596
      %v629 = vunpack.c.l.b16 %v597
      %v630 = vunpack.c.l.b16 %v598
      %v631 = vunpack.c.l.b16 %v599
      %v632 = vunpack.c.l.b16 %v600
      %v633 = vunpack.c.l.b16 %v601
      %v634 = vunpack.c.l.b16 %v602
      %v635 = vunpack.c.l.b16 %v603
      %v636 = vunpack.c.l.b16 %v604
      %v637 = vunpack.c.l.b16 %v605
      %v638 = vunpack.c.l.b16 %v606
      %v639 = vunpack.c.l.b16 %v607
      %v640 = vunpack.c.l.b16 %v608
      %v641 = vpack.c.b16 %v626, %v625
      %v642 = vpack.c.b16 %v628, %v627
      %v643 = vpack.c.b16 %v630, %v629
      %v644 = vpack.c.b16 %v632, %v631
      %v645 = vpack.c.b16 %v634, %v633
      %v646 = vpack.c.b16 %v636, %v635
      %v647 = vpack.c.b16 %v638, %v637
      %v648 = vpack.c.b16 %v640, %v639
      %657 = vmatpush.bf16.msra.mxu0 %v648
      %658 = vmatpush.bf16.msra.mxu0 %v647
      %659 = vmatpush.bf16.msra.mxu0 %v646
      %660 = vmatpush.bf16.msra.mxu0 %v645
      %661 = vmatpush.bf16.msra.mxu0 %v644
      %662 = vmatpush.bf16.msra.mxu0 %v643
      %663 = vmatpush.bf16.msra.mxu0 %v642
      %664 = vmatpush.bf16.msra.mxu0 %v641
      %665 = vmatmul.bf16.gmra.mxu0 %v545
      %v666 = vpop.f32.mrf.mxu0
      %v667 = vadd.f32 0.0, %v666
      %v668 = vpop.f32.mrf.mxu0
      %v669 = vadd.f32 0.0, %v668
      %670 = vmatmul.bf16.gmra.mxu0 %v546
      %v671 = vpop.f32.mrf.mxu0
      %v672 = vadd.f32 0.0, %v671
      %v673 = vpop.f32.mrf.mxu0
      %v674 = vadd.f32 0.0, %v673
      %675 = vmatmul.bf16.gmra.mxu0 %v547
      %v676 = vpop.f32.mrf.mxu0
      %v677 = vadd.f32 0.0, %v676
      %v678 = vpop.f32.mrf.mxu0
      %v679 = vadd.f32 0.0, %v678
      %680 = vmatmul.bf16.gmra.mxu0 %v548
      %v681 = vpop.f32.mrf.mxu0
      %v682 = vadd.f32 0.0, %v681
      %v683 = vpop.f32.mrf.mxu0
      %v684 = vadd.f32 0.0, %v683
      %685 = vmatmul.bf16.gmra.mxu0 %v549
      %v686 = vpop.f32.mrf.mxu0
      %v687 = vadd.f32 0.0, %v686
      %v688 = vpop.f32.mrf.mxu0
      %v689 = vadd.f32 0.0, %v688
      %690 = vmatmul.bf16.gmra.mxu0 %v550
      %v691 = vpop.f32.mrf.mxu0
      %v692 = vadd.f32 0.0, %v691
      %v693 = vpop.f32.mrf.mxu0
      %v694 = vadd.f32 0.0, %v693
      %695 = vmatmul.bf16.gmra.mxu0 %v551
      %v696 = vpop.f32.mrf.mxu0
      %v697 = vadd.f32 0.0, %v696
      %v698 = vpop.f32.mrf.mxu0
      %v699 = vadd.f32 0.0, %v698
      %700 = vmatmul.bf16.gmra.mxu0 %v552
      %v701 = vpop.f32.mrf.mxu0
      %v702 = vadd.f32 0.0, %v701
      %v703 = vpop.f32.mrf.mxu0
      %v704 = vadd.f32 0.0, %v703
      %705 = vmatmul.bf16.gmra.mxu0 %v553
      %v706 = vpop.f32.mrf.mxu0
      %v707 = vadd.f32 0.0, %v706
      %v708 = vpop.f32.mrf.mxu0
      %v709 = vadd.f32 0.0, %v708
      %710 = vmatmul.bf16.gmra.mxu0 %v554
      %v711 = vpop.f32.mrf.mxu0
      %v712 = vadd.f32 0.0, %v711
      %v713 = vpop.f32.mrf.mxu0
      %v714 = vadd.f32 0.0, %v713
      %715 = vmatmul.bf16.gmra.mxu0 %v555
      %v716 = vpop.f32.mrf.mxu0
      %v717 = vadd.f32 0.0, %v716
      %v718 = vpop.f32.mrf.mxu0
      %v719 = vadd.f32 0.0, %v718
      %720 = vmatmul.bf16.gmra.mxu0 %v556
      %v721 = vpop.f32.mrf.mxu0
      %v722 = vadd.f32 0.0, %v721
      %v723 = vpop.f32.mrf.mxu0
      %v724 = vadd.f32 0.0, %v723
      %725 = vmatmul.bf16.gmra.mxu0 %v557
      %v726 = vpop.f32.mrf.mxu0
      %v727 = vadd.f32 0.0, %v726
      %v728 = vpop.f32.mrf.mxu0
      %v729 = vadd.f32 0.0, %v728
      %730 = vmatmul.bf16.gmra.mxu0 %v558
      %v731 = vpop.f32.mrf.mxu0
      %v732 = vadd.f32 0.0, %v731
      %v733 = vpop.f32.mrf.mxu0
      %v734 = vadd.f32 0.0, %v733
      %735 = vmatmul.bf16.gmra.mxu0 %v559
      %v736 = vpop.f32.mrf.mxu0
      %v737 = vadd.f32 0.0, %v736
      %v738 = vpop.f32.mrf.mxu0
      %v739 = vadd.f32 0.0, %v738
      %740 = vmatmul.bf16.gmra.mxu0 %v560
      %v741 = vpop.f32.mrf.mxu0
      %v742 = vadd.f32 0.0, %v741
      %v743 = vpop.f32.mrf.mxu0
      %v744 = vadd.f32 0.0, %v743
      %745 = vdwg.mxu0
      %v746 = vadd.f32 %v561, %v667
      %v747 = vadd.f32 %v562, %v669
      %v748 = vadd.f32 %v563, %v672
      %v749 = vadd.f32 %v564, %v674
      %v750 = vadd.f32 %v565, %v677
      %v751 = vadd.f32 %v566, %v679
      %v752 = vadd.f32 %v567, %v682
      %v753 = vadd.f32 %v568, %v684
      %v754 = vadd.f32 %v569, %v687
      %v755 = vadd.f32 %v570, %v689
      %v756 = vadd.f32 %v571, %v692
      %v757 = vadd.f32 %v572, %v694
      %v758 = vadd.f32 %v573, %v697
      %v759 = vadd.f32 %v574, %v699
      %v760 = vadd.f32 %v575, %v702
      %v761 = vadd.f32 %v576, %v704
      %v762 = vadd.f32 %v577, %v707
      %v763 = vadd.f32 %v578, %v709
      %v764 = vadd.f32 %v579, %v712
      %v765 = vadd.f32 %v580, %v714
      %v766 = vadd.f32 %v581, %v717
      %v767 = vadd.f32 %v582, %v719
      %v768 = vadd.f32 %v583, %v722
      %v769 = vadd.f32 %v584, %v724
      %v770 = vadd.f32 %v585, %v727
      %v771 = vadd.f32 %v586, %v729
      %v772 = vadd.f32 %v587, %v732
      %v773 = vadd.f32 %v588, %v734
      %v774 = vadd.f32 %v589, %v737
      %v775 = vadd.f32 %v590, %v739
      %v776 = vadd.f32 %v591, %v742
      %v777 = vadd.f32 %v592, %v744
      %778 = vst [vmem:[#allocation2] sm:$0xff] %v746
      %779 = vst [vmem:[#allocation2 + $0x8] sm:$0xff] %v747
      %780 = vst [vmem:[#allocation2 + $0x10] sm:$0xff] %v748
      %781 = vst [vmem:[#allocation2 + $0x18] sm:$0xff] %v749
      %782 = vst [vmem:[#allocation2 + $0x20] sm:$0xff] %v750
      %783 = vst [vmem:[#allocation2 + $0x28] sm:$0xff] %v751
      %784 = vst [vmem:[#allocation2 + $0x30] sm:$0xff] %v752
      %785 = vst [vmem:[#allocation2 + $0x38] sm:$0xff] %v753
      %786 = vst [vmem:[#allocation2 + $0x40] sm:$0xff] %v754
      %787 = vst [vmem:[#allocation2 + $0x48] sm:$0xff] %v755
      %788 = vst [vmem:[#allocation2 + $0x50] sm:$0xff] %v756
      %789 = vst [vmem:[#allocation2 + $0x58] sm:$0xff] %v757
      %790 = vst [vmem:[#allocation2 + $0x60] sm:$0xff] %v758
      %791 = vst [vmem:[#allocation2 + $0x68] sm:$0xff] %v759
      %792 = vst [vmem:[#allocation2 + $0x70] sm:$0xff] %v760
      %793 = vst [vmem:[#allocation2 + $0x78] sm:$0xff] %v761
      %794 = vst [vmem:[#allocation2 + $0x80] sm:$0xff] %v762
      %795 = vst [vmem:[#allocation2 + $0x88] sm:$0xff] %v763
      %796 = vst [vmem:[#allocation2 + $0x90] sm:$0xff] %v764
      %797 = vst [vmem:[#allocation2 + $0x98] sm:$0xff] %v765
      %798 = vst [vmem:[#allocation2 + $0xa0] sm:$0xff] %v766
      %799 = vst [vmem:[#allocation2 + $0xa8] sm:$0xff] %v767
      %800 = vst [vmem:[#allocation2 + $0xb0] sm:$0xff] %v768
      %801 = vst [vmem:[#allocation2 + $0xb8] sm:$0xff] %v769
      %802 = vst [vmem:[#allocation2 + $0xc0] sm:$0xff] %v770
      %803 = vst [vmem:[#allocation2 + $0xc8] sm:$0xff] %v771
      %804 = vst [vmem:[#allocation2 + $0xd0] sm:$0xff] %v772
      %805 = vst [vmem:[#allocation2 + $0xd8] sm:$0xff] %v773
      %806 = vst [vmem:[#allocation2 + $0xe0] sm:$0xff] %v774
      %807 = vst [vmem:[#allocation2 + $0xe8] sm:$0xff] %v775
      %808 = vst [vmem:[#allocation2 + $0xf0] sm:$0xff] %v776
      %809 = vst [vmem:[#allocation2 + $0xf8] sm:$0xff] %v777
      // Predicated region
      $region45: #{upblock_forward.7} parent=39 // pred_check
        %p810 = pneg %p341
      $region46: #{upblock_forward.7} parent=39 // pred_check_branch
        %812 = sbr.rel (%p810) target = $region48
      $region47: #{upblock_forward.7} parent=39 // pred_region
        %v813 = vld [vmem:[#allocation2] sm:$0xff]
        %v814 = vld [vmem:[#allocation2 + $0x8] sm:$0xff]
        %v815 = vld [vmem:[#allocation2 + $0x10] sm:$0xff]
        %v816 = vld [vmem:[#allocation2 + $0x18] sm:$0xff]
        %v817 = vld [vmem:[#allocation2 + $0x20] sm:$0xff]
        %v818 = vld [vmem:[#allocation2 + $0x28] sm:$0xff]
        %v819 = vld [vmem:[#allocation2 + $0x30] sm:$0xff]
        %v820 = vld [vmem:[#allocation2 + $0x38] sm:$0xff]
        %v821 = vld [vmem:[#allocation2 + $0x40] sm:$0xff]
        %v822 = vld [vmem:[#allocation2 + $0x48] sm:$0xff]
        %v823 = vld [vmem:[#allocation2 + $0x50] sm:$0xff]
        %v824 = vld [vmem:[#allocation2 + $0x58] sm:$0xff]
        %v825 = vld [vmem:[#allocation2 + $0x60] sm:$0xff]
        %v826 = vld [vmem:[#allocation2 + $0x68] sm:$0xff]
        %v827 = vld [vmem:[#allocation2 + $0x70] sm:$0xff]
        %v828 = vld [vmem:[#allocation2 + $0x78] sm:$0xff]
        %v829 = vld [vmem:[#allocation2 + $0x80] sm:$0xff]
        %v830 = vld [vmem:[#allocation2 + $0x88] sm:$0xff]
        %v831 = vld [vmem:[#allocation2 + $0x90] sm:$0xff]
        %v832 = vld [vmem:[#allocation2 + $0x98] sm:$0xff]
        %v833 = vld [vmem:[#allocation2 + $0xa0] sm:$0xff]
        %v834 = vld [vmem:[#allocation2 + $0xa8] sm:$0xff]
        %v835 = vld [vmem:[#allocation2 + $0xb0] sm:$0xff]
        %v836 = vld [vmem:[#allocation2 + $0xb8] sm:$0xff]
        %v837 = vld [vmem:[#allocation2 + $0xc0] sm:$0xff]
        %v838 = vld [vmem:[#allocation2 + $0xc8] sm:$0xff]
        %v839 = vld [vmem:[#allocation2 + $0xd0] sm:$0xff]
        %v840 = vld [vmem:[#allocation2 + $0xd8] sm:$0xff]
        %v841 = vld [vmem:[#allocation2 + $0xe0] sm:$0xff]
        %v842 = vld [vmem:[#allocation2 + $0xe8] sm:$0xff]
        %v843 = vld [vmem:[#allocation2 + $0xf0] sm:$0xff]
        %v844 = vld [vmem:[#allocation2 + $0xf8] sm:$0xff]
        %v845 = vld [vmem:[%s325] sm:$0x1]
        %v847 = vperm.slane %v845, 0
        %v849 = vadd.f32 %v813, %v847
        %v850 = vadd.f32 %v814, %v847
        %v851 = vadd.f32 %v815, %v847
        %v852 = vadd.f32 %v816, %v847
        %v853 = vadd.f32 %v817, %v847
        %v854 = vadd.f32 %v818, %v847
        %v855 = vadd.f32 %v819, %v847
        %v856 = vadd.f32 %v820, %v847
        %v857 = vadd.f32 %v821, %v847
        %v858 = vadd.f32 %v822, %v847
        %v859 = vadd.f32 %v823, %v847
        %v860 = vadd.f32 %v824, %v847
        %v861 = vadd.f32 %v825, %v847
        %v862 = vadd.f32 %v826, %v847
        %v863 = vadd.f32 %v827, %v847
        %v864 = vadd.f32 %v828, %v847
        %v865 = vadd.f32 %v829, %v847
        %v866 = vadd.f32 %v830, %v847
        %v867 = vadd.f32 %v831, %v847
        %v868 = vadd.f32 %v832, %v847
        %v869 = vadd.f32 %v833, %v847
        %v870 = vadd.f32 %v834, %v847
        %v871 = vadd.f32 %v835, %v847
        %v872 = vadd.f32 %v836, %v847
        %v873 = vadd.f32 %v837, %v847
        %v874 = vadd.f32 %v838, %v847
        %v875 = vadd.f32 %v839, %v847
        %v876 = vadd.f32 %v840, %v847
        %v877 = vadd.f32 %v841, %v847
        %v878 = vadd.f32 %v842, %v847
        %v879 = vadd.f32 %v843, %v847
        %v880 = vadd.f32 %v844, %v847
        %v881 = vmax.f32 %v849, 0.0
        %v882 = vmax.f32 %v850, 0.0
        %v883 = vmax.f32 %v851, 0.0
        %v884 = vmax.f32 %v852, 0.0
        %v885 = vmax.f32 %v853, 0.0
        %v886 = vmax.f32 %v854, 0.0
        %v887 = vmax.f32 %v855, 0.0
        %v888 = vmax.f32 %v856, 0.0
        %v889 = vmax.f32 %v857, 0.0
        %v890 = vmax.f32 %v858, 0.0
        %v891 = vmax.f32 %v859, 0.0
        %v892 = vmax.f32 %v860, 0.0
        %v893 = vmax.f32 %v861, 0.0
        %v894 = vmax.f32 %v862, 0.0
        %v895 = vmax.f32 %v863, 0.0
        %v896 = vmax.f32 %v864, 0.0
        %v897 = vmax.f32 %v865, 0.0
        %v898 = vmax.f32 %v866, 0.0
        %v899 = vmax.f32 %v867, 0.0
        %v900 = vmax.f32 %v868, 0.0
        %v901 = vmax.f32 %v869, 0.0
        %v902 = vmax.f32 %v870, 0.0
        %v903 = vmax.f32 %v871, 0.0
        %v904 = vmax.f32 %v872, 0.0
        %v905 = vmax.f32 %v873, 0.0
        %v906 = vmax.f32 %v874, 0.0
        %v907 = vmax.f32 %v875, 0.0
        %v908 = vmax.f32 %v876, 0.0
        %v909 = vmax.f32 %v877, 0.0
        %v910 = vmax.f32 %v878, 0.0
        %v911 = vmax.f32 %v879, 0.0
        %v912 = vmax.f32 %v880, 0.0
        %913 = vst [vmem:[%s339] sm:$0xff] %v881
        %914 = vst [vmem:[%s339 + $0x8] sm:$0xff] %v882
        %915 = vst [vmem:[%s339 + $0x10] sm:$0xff] %v883
        %916 = vst [vmem:[%s339 + $0x18] sm:$0xff] %v884
        %917 = vst [vmem:[%s339 + $0x20] sm:$0xff] %v885
        %918 = vst [vmem:[%s339 + $0x28] sm:$0xff] %v886
        %919 = vst [vmem:[%s339 + $0x30] sm:$0xff] %v887
        %920 = vst [vmem:[%s339 + $0x38] sm:$0xff] %v888
        %921 = vst [vmem:[%s339 + $0x40] sm:$0xff] %v889
        %922 = vst [vmem:[%s339 + $0x48] sm:$0xff] %v890
        %923 = vst [vmem:[%s339 + $0x50] sm:$0xff] %v891
        %924 = vst [vmem:[%s339 + $0x58] sm:$0xff] %v892
        %925 = vst [vmem:[%s339 + $0x60] sm:$0xff] %v893
        %926 = vst [vmem:[%s339 + $0x68] sm:$0xff] %v894
        %927 = vst [vmem:[%s339 + $0x70] sm:$0xff] %v895
        %928 = vst [vmem:[%s339 + $0x78] sm:$0xff] %v896
        %929 = vst [vmem:[%s339 + $0x80] sm:$0xff] %v897
        %930 = vst [vmem:[%s339 + $0x88] sm:$0xff] %v898
        %931 = vst [vmem:[%s339 + $0x90] sm:$0xff] %v899
        %932 = vst [vmem:[%s339 + $0x98] sm:$0xff] %v900
        %933 = vst [vmem:[%s339 + $0xa0] sm:$0xff] %v901
        %934 = vst [vmem:[%s339 + $0xa8] sm:$0xff] %v902
        %935 = vst [vmem:[%s339 + $0xb0] sm:$0xff] %v903
        %936 = vst [vmem:[%s339 + $0xb8] sm:$0xff] %v904
        %937 = vst [vmem:[%s339 + $0xc0] sm:$0xff] %v905
        %938 = vst [vmem:[%s339 + $0xc8] sm:$0xff] %v906
        %939 = vst [vmem:[%s339 + $0xd0] sm:$0xff] %v907
        %940 = vst [vmem:[%s339 + $0xd8] sm:$0xff] %v908
        %941 = vst [vmem:[%s339 + $0xe0] sm:$0xff] %v909
        %942 = vst [vmem:[%s339 + $0xe8] sm:$0xff] %v910
        %943 = vst [vmem:[%s339 + $0xf0] sm:$0xff] %v911
        %944 = vst [vmem:[%s339 + $0xf8] sm:$0xff] %v912
      $region48: #{upblock_forward.7} parent=39 // pred_fallthru
        _
      %s945 = smul.u32 32, %s21
      %p946 = scmp.lt.s32.totalorder %s945, 63
      %s947 = scalar_select %p946, %s945, 63
      %p948 = scmp.lt.s32.totalorder %s22, 0
      %s949 = scalar_select %p948, %s22, 0
      %s950 = sadd.s32 %s949, %s947
      %s951 = smul.addr %s950, 8
      %s952 = scalar_lea.vmem %s5, %s951
      // Predicated region
      $region49: #{upblock_forward.7} parent=39 // pred_check
        %p953 = pneg %p189
      $region50: #{upblock_forward.7} parent=39 // pred_check_branch
        %955 = sbr.rel (%p953) target = $region52
      $region51: #{upblock_forward.7} parent=39 // pred_region
        %s956 = smul.u32 32, %s21
      $region52: #{upblock_forward.7} parent=39 // pred_fallthru
        _
    $region40: #{upblock_forward.7} parent=5 // pred_fallthru
      _
    %p957 = scmp.le.s32.totalorder 2, %s11
    // Predicated region
    $region53: #{upblock_forward.7} parent=5 // pred_check
      %p958 = pneg %p957
    $region54: #{upblock_forward.7} parent=5 // pred_check_branch
      %960 = sbr.rel (%p958) target = $region56
    $region55: #{upblock_forward.7} parent=5 // pred_region
      %s961 = ssub.s32 %s11, 2
      // Predicated region
      $region57: #{upblock_forward.7} parent=55 // pred_check
        %p962 = pneg %p195
      $region58: #{upblock_forward.7} parent=55 // pred_check_branch
        %964 = sbr.rel (%p962) target = $region60
      $region59: #{upblock_forward.7} parent=55 // pred_region
        %s965 = smul.u32 32, %s24
        %p966 = scmp.lt.s32.totalorder %s965, 63
        %s967 = scalar_select %p966, %s965, 63
        %p968 = scmp.lt.s32.totalorder %s25, 0
        %s969 = scalar_select %p968, %s25, 0
        %s970 = sadd.s32 %s969, %s967
        %s971 = smul.addr %s970, 8
        %s972 = scalar_lea.vmem %s5, %s971
      $region60: #{upblock_forward.7} parent=55 // pred_fallthru
        _
    $region56: #{upblock_forward.7} parent=5 // pred_fallthru
      _
  $region6: #{upblock_forward.7} parent=0 // loop_footer
    %s15 = sadd.s32 1, %s11
  $region7: #{upblock_forward.7} parent=0 // loop_footer_branch
    %10 = sbr.rel target = $region3
  $region8: #{upblock_forward.7} parent=0 // loop_exit
    _

</llo_original>
